<compile_context>
chip_gen: v5e
topology: v5e:2x2
jax: 0.10.0
libtpu: 0.0.40
codegen_flags: <defaults>
</compile_context>

<pallas_src>
import functools

import numpy as np
import jax
import jax.numpy as jnp
from jax.experimental import pallas as pl
from jax.experimental.pallas import tpu as pltpu


def _round_up(x, m):
    return ((x + m - 1) // m) * m


# --------------------------------------------------------------------------- #
# Kernel 1: fused HarmonicConv message + update (per-edge complex contraction)
# --------------------------------------------------------------------------- #
def _harmonic_conv_kernel(use_conn, M, P, R, C, O, *refs):
    if use_conn:
        xr_ref, xi_ref, cr_ref, ci_ref, pr_ref, pi_ref, f_ref, o_ref = refs
    else:
        xr_ref, xi_ref, pr_ref, pi_ref, f_ref, o_ref = refs

    # Parallel transport, applied ONCE per edge tile and only to input orders p > 0.
    xr_list, xi_list = [], []
    if use_conn:
        cr = cr_ref[...]                     # [1, tE], broadcasts over channel sublanes
        ci = ci_ref[...]
    for p in range(P):
        xr_p = xr_ref[p]                     # [C, tE]
        xi_p = xi_ref[p]
        if use_conn and p > 0:
            xr_list.append(xr_p * cr - xi_p * ci)
            xi_list.append(xr_p * ci + xi_p * cr)
        else:
            xr_list.append(xr_p)
            xi_list.append(xi_p)

    outs = []
    for mo in range(M):
        acc = None
        for p in range(P):
            pr = pr_ref[mo, p]               # [R, tE]  signed precomp e^{i(mo-p)theta}
            pi = pi_ref[mo, p]
            xr_p = xr_list[p]
            xi_p = xi_list[p]
            rows = []
            for r in range(R):               # real rows of prec * x  (k = r*C + c)
                a = pr[r:r + 1]
                b = pi[r:r + 1]
                rows.append(a * xr_p - b * xi_p)
            for r in range(R):               # imaginary rows
                a = pr[r:r + 1]
                b = pi[r:r + 1]
                rows.append(a * xi_p + b * xr_p)
            w = jnp.concatenate(rows, axis=0)                       # [2*R*C, tE]
            d = jnp.dot(f_ref[mo, p], w,
                        preferred_element_type=jnp.float32)         # [2*O, tE]
            acc = d if acc is None else acc + d
        outs.append(acc)
    o_ref[...] = jnp.concatenate(outs, axis=0) if M > 1 else outs[0]


def harmonic_conv(x_re, x_im, edge_index, prec_re, prec_im, radial, phase,
                  max_order, connection=None, *, edge_tile=1024):
    N, P, C = x_re.shape
    E = edge_index.shape[1]
    M = max_order + 1
    R = prec_re.shape[2]
    O = radial.shape[2]

    # PyG MessagePassing(flow='target_to_source', aggr='add'):
    #   x_j = x[edge_index[1]], aggregated into nodes edge_index[0].
    src = edge_index[1]
    dst = edge_index[0]

    # Neighbour gather, edge axis moved to lanes: [P, C, E]
    xj_re = jnp.transpose(x_re[src], (1, 2, 0))
    xj_im = jnp.transpose(x_im[src], (1, 2, 0))

    # Signed precomp selection [M, P, R, E]: prec_sel[mo,p] = e^{i (mo-p) theta} support
    # (|m| selection and sign(m) folded on the host; m == 0 -> zero imaginary plane).
    pre_re_t = jnp.transpose(prec_re, (1, 2, 0))                    # [M, R, E]
    pre_im_t = jnp.transpose(prec_im, (1, 2, 0))
    sel_re, sel_im = [], []
    for mo in range(M):
        row_re, row_im = [], []
        for p in range(P):
            m = mo - p
            sgn = float(np.sign(m))
            row_re.append(pre_re_t[abs(m)])
            row_im.append(sgn * pre_im_t[abs(m)])
        sel_re.append(jnp.stack(row_re))
        sel_im.append(jnp.stack(row_im))
    prec_sel_re = jnp.stack(sel_re)                                 # [M, P, R, E]
    prec_sel_im = jnp.stack(sel_im)

    # Packed complex filters [M, P, 2O, 2RC]:  [y_re; y_im] = filt[mo,p] @ [W_re; W_im]
    filt_rows = []
    for mo in range(M):
        row = []
        for p in range(P):
            m = mo - p
            sgn = float(np.sign(m))
            idx = p * M + mo                      # separate_streams=True stream layout
            rad = radial[idx]                     # [R, O, C]
            if phase is not None:
                ph = phase[idx]                   # [O, C]
                f_re = rad * jnp.cos(ph)[None]
                f_im = rad * (sgn * jnp.sin(ph))[None]
            else:
                f_re = rad
                f_im = jnp.zeros_like(rad)
            fre_t = jnp.transpose(f_re, (1, 0, 2)).reshape(O, R * C)   # [O, R*C]
            fim_t = jnp.transpose(f_im, (1, 0, 2)).reshape(O, R * C)
            top = jnp.concatenate([fre_t, -fim_t], axis=1)
            bot = jnp.concatenate([fim_t, fre_t], axis=1)
            row.append(jnp.concatenate([top, bot], axis=0))             # [2O, 2RC]
        filt_rows.append(jnp.stack(row))
    filt = jnp.stack(filt_rows)                                         # [M, P, 2O, 2RC]

    # Edge tiling: lane-aligned tile, zero-pad edge axis (padded edges contribute 0).
    tE = min(edge_tile, _round_up(E, 128))
    E_pad = _round_up(E, tE)
    pad = E_pad - E

    def pad_edges(a):
        if pad == 0:
            return a
        cfg = [(0, 0)] * (a.ndim - 1) + [(0, pad)]
        return jnp.pad(a, cfg)

    xj_re, xj_im = pad_edges(xj_re), pad_edges(xj_im)
    prec_sel_re, prec_sel_im = pad_edges(prec_sel_re), pad_edges(prec_sel_im)

    use_conn = (connection is not None) and (P > 1)
    inputs = [xj_re, xj_im]
    in_specs = [pl.BlockSpec((P, C, tE), lambda et: (0, 0, et))] * 2
    if use_conn:
        conn_re, conn_im = connection
        inputs += [pad_edges(conn_re.reshape(1, E)),
                   pad_edges(conn_im.reshape(1, E))]
        in_specs += [pl.BlockSpec((1, tE), lambda et: (0, et))] * 2
    inputs += [prec_sel_re, prec_sel_im, filt]
    in_specs += [pl.BlockSpec((M, P, R, tE), lambda et: (0, 0, 0, et))] * 2
    in_specs += [pl.BlockSpec((M, P, 2 * O, 2 * R * C), lambda et: (0, 0, 0, 0))]

    kernel = functools.partial(_harmonic_conv_kernel, use_conn, M, P, R, C, O)
    y = pl.pallas_call(
        kernel,
        out_shape=jax.ShapeDtypeStruct((M * 2 * O, E_pad), jnp.float32),
        grid=(E_pad // tE,),
        in_specs=in_specs,
        out_specs=pl.BlockSpec((M * 2 * O, tE), lambda et: (0, et)),
        compiler_params=pltpu.CompilerParams(dimension_semantics=("parallel",)),
    )(*inputs)

    # Scatter-add of the (small) per-edge results into target nodes.
    # TODO(synk): fold this aggregation into the kernel with CSR row offsets via
    #             PrefetchScalarGridSpec once an edge-sorted graph layout is available.
    dst_pad = jnp.pad(dst, (0, pad)) if pad else dst
    agg = jax.ops.segment_sum(y.T, dst_pad, num_segments=N)         # [N, M*2O]
    agg = agg.reshape(N, M, 2, O)
    return agg[:, :, 0, :], agg[:, :, 1, :]                         # [N, M, O] re / im


# --------------------------------------------------------------------------- #
# Kernels 2-4: ComplexNonLin variants (plain / +residual / +ComplexLin residual)
# --------------------------------------------------------------------------- #
def _finish_nonlin(zr, zi, b, or_ref, oi_ref):
    sq = zr * zr + zi * zi
    maxed = jnp.maximum(sq, 1e-12)                 # HSN magnitudes(), EPS = 1e-12
    inv = jax.lax.rsqrt(maxed)                     # EUP rsqrt instead of sqrt + divide
    mag = maxed * inv                              # == sqrt(maxed)
    scale = jnp.maximum(mag + b, 0.0) * inv        # relu(|z| + b) / |z|
    or_ref[...] = scale * zr
    oi_ref[...] = scale * zi


def _nonlin_kernel(xr_ref, xi_ref, b_ref, or_ref, oi_ref):
    _finish_nonlin(xr_ref[...], xi_ref[...], b_ref[...], or_ref, oi_ref)


def _nonlin_res_kernel(hr_ref, hi_ref, rr_ref, ri_ref, b_ref, or_ref, oi_ref):
    _finish_nonlin(hr_ref[...] + rr_ref[...], hi_ref[...] + ri_ref[...],
                   b_ref[...], or_ref, oi_ref)


def _lin_res_nonlin_kernel(hr_ref, hi_ref, xr_ref, xi_ref, w_ref, bl_ref, bn_ref,
                           or_ref, oi_ref):
    w = w_ref[...]
    bl = bl_ref[...]
    zr = hr_ref[...] + jnp.dot(xr_ref[...], w, preferred_element_type=jnp.float32) + bl
    zi = hi_ref[...] + jnp.dot(xi_ref[...], w, preferred_element_type=jnp.float32) + bl
    _finish_nonlin(zr, zi, bn_ref[...], or_ref, oi_ref)


def _pad_rows(a, rows_pad):
    pad = rows_pad - a.shape[0]
    return jnp.pad(a, ((0, pad), (0, 0))) if pad else a


def complex_nonlin(x_re, x_im, bias, *, row_tile=1024):
    shape = x_re.shape
    C = shape[-1]
    rows = int(np.prod(shape[:-1]))
    tR = min(row_tile, _round_up(rows, 8))
    rows_pad = _round_up(rows, tR)
    xr = _pad_rows(x_re.reshape(rows, C), rows_pad)
    xi = _pad_rows(x_im.reshape(rows, C), rows_pad)
    spec = pl.BlockSpec((tR, C), lambda i: (i, 0))
    bspec = pl.BlockSpec((1, C), lambda i: (0, 0))
    out_sds = jax.ShapeDtypeStruct((rows_pad, C), jnp.float32)
    o_re, o_im = pl.pallas_call(
        _nonlin_kernel,
        out_shape=(out_sds, out_sds),
        grid=(rows_pad // tR,),
        in_specs=[spec, spec, bspec],
        out_specs=(spec, spec),
        compiler_params=pltpu.CompilerParams(dimension_semantics=("parallel",)),
    )(xr, xi, bias.reshape(1, C))
    return o_re[:rows].reshape(shape), o_im[:rows].reshape(shape)


def complex_residual_nonlin(h_re, h_im, r_re, r_im, bias, *, row_tile=1024):
    shape = h_re.shape
    C = shape[-1]
    rows = int(np.prod(shape[:-1]))
    tR = min(row_tile, _round_up(rows, 8))
    rows_pad = _round_up(rows, tR)
    hr = _pad_rows(h_re.reshape(rows, C), rows_pad)
    hi = _pad_rows(h_im.reshape(rows, C), rows_pad)
    rr = _pad_rows(r_re.reshape(rows, C), rows_pad)
    ri = _pad_rows(r_im.reshape(rows, C), rows_pad)
    spec = pl.BlockSpec((tR, C), lambda i: (i, 0))
    bspec = pl.BlockSpec((1, C), lambda i: (0, 0))
    out_sds = jax.ShapeDtypeStruct((rows_pad, C), jnp.float32)
    o_re, o_im = pl.pallas_call(
        _nonlin_res_kernel,
        out_shape=(out_sds, out_sds),
        grid=(rows_pad // tR,),
        in_specs=[spec, spec, spec, spec, bspec],
        out_specs=(spec, spec),
        compiler_params=pltpu.CompilerParams(dimension_semantics=("parallel",)),
    )(hr, hi, rr, ri, bias.reshape(1, C))
    return o_re[:rows].reshape(shape), o_im[:rows].reshape(shape)


def complex_lin_residual_nonlin(h_re, h_im, x_re, x_im, weight, b_lin, b_nl,
                                *, row_tile=1024):
    shape = h_re.shape
    Cout = shape[-1]
    Cin = x_re.shape[-1]
    rows = int(np.prod(shape[:-1]))
    tR = min(row_tile, _round_up(rows, 8))
    rows_pad = _round_up(rows, tR)
    hr = _pad_rows(h_re.reshape(rows, Cout), rows_pad)
    hi = _pad_rows(h_im.reshape(rows, Cout), rows_pad)
    xr = _pad_rows(x_re.reshape(rows, Cin), rows_pad)
    xi = _pad_rows(x_im.reshape(rows, Cin), rows_pad)
    hspec = pl.BlockSpec((tR, Cout), lambda i: (i, 0))
    xspec = pl.BlockSpec((tR, Cin), lambda i: (i, 0))
    wspec = pl.BlockSpec((Cin, Cout), lambda i: (0, 0))
    bspec = pl.BlockSpec((1, Cout), lambda i: (0, 0))
    out_sds = jax.ShapeDtypeStruct((rows_pad, Cout), jnp.float32)
    o_re, o_im = pl.pallas_call(
        _lin_res_nonlin_kernel,
        out_shape=(out_sds, out_sds),
        grid=(rows_pad // tR,),
        in_specs=[hspec, hspec, xspec, xspec, wspec, bspec, bspec],
        out_specs=(hspec, hspec),
        compiler_params=pltpu.CompilerParams(dimension_semantics=("parallel",)),
    )(hr, hi, xr, xi, weight, b_lin.reshape(1, Cout), b_nl.reshape(1, Cout))
    return o_re[:rows].reshape(shape), o_im[:rows].reshape(shape)


# --------------------------------------------------------------------------- #
# HarmonicResNetBlock forward
# --------------------------------------------------------------------------- #
def harmonic_resnet_block(params, x_re, x_im, edge_index, prec_re, prec_im,
                          conn_re, conn_im, *, max_order=1, prev_order=1):
    N, P, Cin = x_re.shape
    Cout = params["radial1"].shape[2]
    M = max_order + 1

    conn = (conn_re, conn_im)
    conv1_conn = None if prev_order == 0 else conn   # reference drops the connection
                                                     # for conv1 when prev_order == 0

    h_re, h_im = harmonic_conv(x_re, x_im, edge_index, prec_re, prec_im,
                               params["radial1"], params["phase1"], max_order,
                               connection=conv1_conn)
    h_re, h_im = complex_nonlin(h_re, h_im, params["nl1_bias"])
    h_re, h_im = harmonic_conv(h_re, h_im, edge_index, prec_re, prec_im,
                               params["radial2"], params["phase2"], max_order,
                               connection=conn)

    # Residual path (broadcast over the rotation-order axis when P == 1, like PyTorch).
    if P == M:
        r_re, r_im = x_re, x_im
    elif P == 1:
        r_re = jnp.broadcast_to(x_re, (N, M, Cin))
        r_im = jnp.broadcast_to(x_im, (N, M, Cin))
    else:
        raise ValueError("incompatible rotation-order axes for the residual add")

    if Cin != Cout:
        # projection + residual add + final nonlinearity fused in one kernel
        return complex_lin_residual_nonlin(h_re, h_im, r_re, r_im,
                                           params["lin_w"], params["lin_b"],
                                           params["nl2_bias"])
    return complex_residual_nonlin(h_re, h_im, r_re, r_im, params["nl2_bias"])


# --------------------------------------------------------------------------- #
# Pure-JAX reference (mirrors the HSN math, used only for verification)
# --------------------------------------------------------------------------- #
def _reference_block(params, x_re, x_im, edge_index, prec_re, prec_im,
                     conn_re, conn_im, max_order, prev_order):
    src, dst = edge_index[1], edge_index[0]
    N = x_re.shape[0]
    M = max_order + 1
    R = prec_re.shape[2]

    def conv(xr, xi, radial, phase, use_conn):
        P, C = xr.shape[1], xr.shape[2]
        O = radial.shape[2]
        xjr, xji = xr[src], xi[src]                      # [E, P, C]
        if use_conn and P > 1:
            cr, ci = conn_re[:, None, :], conn_im[:, None, :]
            rot_r = xjr * cr - xji * ci
            rot_i = xjr * ci + xji * cr
            pmask = (jnp.arange(P) > 0)[None, :, None]
            xjr = jnp.where(pmask, rot_r, xjr)
            xji = jnp.where(pmask, rot_i, xji)
        out_r = jnp.zeros((N, M, O), jnp.float32)
        out_i = jnp.zeros((N, M, O), jnp.float32)
        for mo in range(M):
            acc_r = jnp.zeros((N, O), jnp.float32)
            acc_i = jnp.zeros((N, O), jnp.float32)
            for p in range(P):
                m = mo - p
                sgn = float(np.sign(m))
                pr = prec_re[:, abs(m), :]
                pi = sgn * prec_im[:, abs(m), :]
                msg_r = pr[:, :, None] * xjr[:, p, None, :] - pi[:, :, None] * xji[:, p, None, :]
                msg_i = pr[:, :, None] * xji[:, p, None, :] + pi[:, :, None] * xjr[:, p, None, :]
                agg_r = jax.ops.segment_sum(msg_r, dst, num_segments=N).reshape(N, R * C)
                agg_i = jax.ops.segment_sum(msg_i, dst, num_segments=N).reshape(N, R * C)
                idx = p * M + mo
                rad = radial[idx]
                if phase is not None:
                    ph = phase[idx]
                    f_r = rad * jnp.cos(ph)[None]
                    f_i = rad * (sgn * jnp.sin(ph))[None]
                else:
                    f_r, f_i = rad, jnp.zeros_like(rad)
                f_r = jnp.transpose(f_r, (0, 2, 1)).reshape(R * C, O)
                f_i = jnp.transpose(f_i, (0, 2, 1)).reshape(R * C, O)
                acc_r = acc_r + agg_r @ f_r - agg_i @ f_i
                acc_i = acc_i + agg_r @ f_i + agg_i @ f_r
            out_r = out_r.at[:, mo].set(acc_r)
            out_i = out_i.at[:, mo].set(acc_i)
        return out_r, out_i

    def nonlin(zr, zi, b):
        mag = jnp.sqrt(jnp.maximum(zr * zr + zi * zi, 1e-12))
        scale = jnp.maximum(mag + b, 0.0) / mag
        return scale * zr, scale * zi

    hr, hi = conv(x_re, x_im, params["radial1"], params["phase1"], prev_order > 0)
    hr, hi = nonlin(hr, hi, params["nl1_bias"])
    hr, hi = conv(hr, hi, params["radial2"], params["phase2"], True)
    Cin = x_re.shape[-1]
    Cout = params["radial1"].shape[2]
    if Cin != Cout:
        r_re = x_re @ params["lin_w"] + params["lin_b"]
        r_im = x_im @ params["lin_w"] + params["lin_b"]
    else:
        r_re, r_im = x_re, x_im
    return nonlin(hr + r_re, hi + r_im, params["nl2_bias"])


# --------------------------------------------------------------------------- #
if __name__ == "__main__":
    key = jax.random.PRNGKey(0)
    N, E = 32, 64                     # nodes, edges
    Cin, Cout = 8, 16                 # in/out channels (different -> residual projection)
    max_order, prev_order, n_rings = 1, 1, 2
    M, P, R = max_order + 1, prev_order + 1, n_rings
    n_conv = (prev_order + 1) * (max_order + 1)     # separate_streams=True

    ks = jax.random.split(key, 14)
    x_re = jax.random.normal(ks[0], (N, P, Cin), jnp.float32)
    x_im = jax.random.normal(ks[1], (N, P, Cin), jnp.float32)
    edge_index = jax.random.randint(ks[2], (2, E), 0, N, dtype=jnp.int32)
    prec_re = jax.random.normal(ks[3], (E, M, R), jnp.float32)
    prec_im = jax.random.normal(ks[4], (E, M, R), jnp.float32)
    theta = jax.random.uniform(ks[5], (E, 1), jnp.float32, 0.0, 2.0 * np.pi)
    conn_re, conn_im = jnp.cos(theta), jnp.sin(theta)   # unit complex parallel transport

    params = {
        "radial1": 0.2 * jax.random.normal(ks[6], (n_conv, R, Cout, Cin), jnp.float32),
        "phase1":  0.2 * jax.random.normal(ks[7], (n_conv, Cout, Cin), jnp.float32),
        "radial2": 0.2 * jax.random.normal(ks[8], (n_conv, R, Cout, Cout), jnp.float32),
        "phase2":  0.2 * jax.random.normal(ks[9], (n_conv, Cout, Cout), jnp.float32),
        "nl1_bias": 0.1 * jax.random.normal(ks[10], (Cout,), jnp.float32),
        "nl2_bias": 0.1 * jax.random.normal(ks[11], (Cout,), jnp.float32),
        "lin_w": (1.0 / np.sqrt(Cin)) * jax.random.normal(ks[12], (Cin, Cout), jnp.float32),
        "lin_b": 0.1 * jax.random.normal(ks[13], (Cout,), jnp.float32),
    }

    fwd = jax.jit(functools.partial(harmonic_resnet_block,
                                    max_order=max_order, prev_order=prev_order))
    out_re, out_im = fwd(params, x_re, x_im, edge_index, prec_re, prec_im,
                         conn_re, conn_im)
    jax.block_until_ready((out_re, out_im))

    assert out_re.shape == (N, M, Cout) and out_im.shape == (N, M, Cout)
    assert bool(jnp.all(jnp.isfinite(out_re))) and bool(jnp.all(jnp.isfinite(out_im)))

    # Verify against the pure-JAX reference of the same module.
    ref_re, ref_im = jax.jit(functools.partial(
        _reference_block, max_order=max_order, prev_order=prev_order))(
        params, x_re, x_im, edge_index, prec_re, prec_im, conn_re, conn_im)
    np.testing.assert_allclose(np.asarray(out_re), np.asarray(ref_re),
                               rtol=2e-3, atol=2e-3)
    np.testing.assert_allclose(np.asarray(out_im), np.asarray(ref_im),
                               rtol=2e-3, atol=2e-3)
    print("KERNEL_OK")
</pallas_src>

<mosaic_0001>
module attributes {stable_mosaic.version = 11 : i64} {
  func.func @_harmonic_conv_kernel(%arg0: i32, %arg1: memref<2x8x128xf32, #tpu.memory_space<vmem>>, %arg2: memref<2x8x128xf32, #tpu.memory_space<vmem>>, %arg3: memref<1x128xf32, #tpu.memory_space<vmem>>, %arg4: memref<1x128xf32, #tpu.memory_space<vmem>>, %arg5: memref<2x2x2x128xf32, #tpu.memory_space<vmem>>, %arg6: memref<2x2x2x128xf32, #tpu.memory_space<vmem>>, %arg7: memref<2x2x32x32xf32, #tpu.memory_space<vmem>>, %arg8: memref<64x128xf32, #tpu.memory_space<vmem>>) attributes {dimension_semantics = [#tpu.dimension_semantics<parallel>], iteration_bounds = array<i64: 1>, scalar_prefetch = 0 : i64, scratch_operands = 0 : i64, tpu.core_type = #tpu.core_type<tc>, window_params = [{transform_indices = @transform_0, window_bounds = array<i64: 2, 8, 128>}, {transform_indices = @transform_1, window_bounds = array<i64: 2, 8, 128>}, {transform_indices = @transform_2, window_bounds = array<i64: 1, 128>}, {transform_indices = @transform_3, window_bounds = array<i64: 1, 128>}, {transform_indices = @transform_4, window_bounds = array<i64: 2, 2, 2, 128>}, {transform_indices = @transform_5, window_bounds = array<i64: 2, 2, 2, 128>}, {pipeline_mode = #tpu.pipeline_mode<synchronous>, transform_indices = @transform_6, window_bounds = array<i64: 2, 2, 32, 32>}, {transform_indices = @transform_7, window_bounds = array<i64: 64, 128>}]} {
    %c0 = arith.constant 0 : index
    %c0_0 = arith.constant 0 : index
    %0 = vector.load %arg3[%c0, %c0_0] : memref<1x128xf32, #tpu.memory_space<vmem>>, vector<1x128xf32>
    %c0_1 = arith.constant 0 : index
    %c0_2 = arith.constant 0 : index
    %1 = vector.load %arg4[%c0_1, %c0_2] : memref<1x128xf32, #tpu.memory_space<vmem>>, vector<1x128xf32>
    %c0_3 = arith.constant 0 : index
    %c0_4 = arith.constant 0 : index
    %c0_5 = arith.constant 0 : index
    %2 = vector.load %arg1[%c0_3, %c0_4, %c0_5] : memref<2x8x128xf32, #tpu.memory_space<vmem>>, vector<1x8x128xf32>
    %3 = vector.shape_cast %2 : vector<1x8x128xf32> to vector<8x128xf32>
    %c0_6 = arith.constant 0 : index
    %c0_7 = arith.constant 0 : index
    %c0_8 = arith.constant 0 : index
    %4 = vector.load %arg2[%c0_6, %c0_7, %c0_8] : memref<2x8x128xf32, #tpu.memory_space<vmem>>, vector<1x8x128xf32>
    %5 = vector.shape_cast %4 : vector<1x8x128xf32> to vector<8x128xf32>
    %c1 = arith.constant 1 : index
    %c0_9 = arith.constant 0 : index
    %c0_10 = arith.constant 0 : index
    %6 = vector.load %arg1[%c1, %c0_9, %c0_10] : memref<2x8x128xf32, #tpu.memory_space<vmem>>, vector<1x8x128xf32>
    %7 = vector.shape_cast %6 : vector<1x8x128xf32> to vector<8x128xf32>
    %c1_11 = arith.constant 1 : index
    %c0_12 = arith.constant 0 : index
    %c0_13 = arith.constant 0 : index
    %8 = vector.load %arg2[%c1_11, %c0_12, %c0_13] : memref<2x8x128xf32, #tpu.memory_space<vmem>>, vector<1x8x128xf32>
    %9 = vector.shape_cast %8 : vector<1x8x128xf32> to vector<8x128xf32>
    %10 = vector.broadcast %0 : vector<1x128xf32> to vector<8x128xf32>
    %11 = arith.mulf %7, %10 : vector<8x128xf32>
    %12 = vector.broadcast %1 : vector<1x128xf32> to vector<8x128xf32>
    %13 = arith.mulf %9, %12 : vector<8x128xf32>
    %14 = arith.subf %11, %13 : vector<8x128xf32>
    %15 = vector.broadcast %1 : vector<1x128xf32> to vector<8x128xf32>
    %16 = arith.mulf %7, %15 : vector<8x128xf32>
    %17 = vector.broadcast %0 : vector<1x128xf32> to vector<8x128xf32>
    %18 = arith.mulf %9, %17 : vector<8x128xf32>
    %19 = arith.addf %16, %18 : vector<8x128xf32>
    %c0_14 = arith.constant 0 : index
    %c0_15 = arith.constant 0 : index
    %c0_16 = arith.constant 0 : index
    %c0_17 = arith.constant 0 : index
    %20 = vector.load %arg5[%c0_14, %c0_15, %c0_16, %c0_17] : memref<2x2x2x128xf32, #tpu.memory_space<vmem>>, vector<1x1x2x128xf32>
    %21 = vector.shape_cast %20 : vector<1x1x2x128xf32> to vector<2x128xf32>
    %c0_18 = arith.constant 0 : index
    %c0_19 = arith.constant 0 : index
    %c0_20 = arith.constant 0 : index
    %c0_21 = arith.constant 0 : index
    %22 = vector.load %arg6[%c0_18, %c0_19, %c0_20, %c0_21] : memref<2x2x2x128xf32, #tpu.memory_space<vmem>>, vector<1x1x2x128xf32>
    %23 = vector.shape_cast %22 : vector<1x1x2x128xf32> to vector<2x128xf32>
    %24 = vector.extract_strided_slice %21 {offsets = [0, 0], sizes = [1, 128], strides = [1, 1]} : vector<2x128xf32> to vector<1x128xf32>
    %25 = vector.extract_strided_slice %23 {offsets = [0, 0], sizes = [1, 128], strides = [1, 1]} : vector<2x128xf32> to vector<1x128xf32>
    %26 = vector.broadcast %24 : vector<1x128xf32> to vector<8x128xf32>
    %27 = arith.mulf %26, %3 : vector<8x128xf32>
    %28 = vector.broadcast %25 : vector<1x128xf32> to vector<8x128xf32>
    %29 = arith.mulf %28, %5 : vector<8x128xf32>
    %30 = arith.subf %27, %29 : vector<8x128xf32>
    %31 = vector.extract_strided_slice %21 {offsets = [1, 0], sizes = [1, 128], strides = [1, 1]} : vector<2x128xf32> to vector<1x128xf32>
    %32 = vector.extract_strided_slice %23 {offsets = [1, 0], sizes = [1, 128], strides = [1, 1]} : vector<2x128xf32> to vector<1x128xf32>
    %33 = vector.broadcast %31 : vector<1x128xf32> to vector<8x128xf32>
    %34 = arith.mulf %33, %3 : vector<8x128xf32>
    %35 = vector.broadcast %32 : vector<1x128xf32> to vector<8x128xf32>
    %36 = arith.mulf %35, %5 : vector<8x128xf32>
    %37 = arith.subf %34, %36 : vector<8x128xf32>
    %38 = vector.extract_strided_slice %21 {offsets = [0, 0], sizes = [1, 128], strides = [1, 1]} : vector<2x128xf32> to vector<1x128xf32>
    %39 = vector.extract_strided_slice %23 {offsets = [0, 0], sizes = [1, 128], strides = [1, 1]} : vector<2x128xf32> to vector<1x128xf32>
    %40 = vector.broadcast %38 : vector<1x128xf32> to vector<8x128xf32>
    %41 = arith.mulf %40, %5 : vector<8x128xf32>
    %42 = vector.broadcast %39 : vector<1x128xf32> to vector<8x128xf32>
    %43 = arith.mulf %42, %3 : vector<8x128xf32>
    %44 = arith.addf %41, %43 : vector<8x128xf32>
    %45 = vector.extract_strided_slice %21 {offsets = [1, 0], sizes = [1, 128], strides = [1, 1]} : vector<2x128xf32> to vector<1x128xf32>
    %46 = vector.extract_strided_slice %23 {offsets = [1, 0], sizes = [1, 128], strides = [1, 1]} : vector<2x128xf32> to vector<1x128xf32>
    %47 = vector.broadcast %45 : vector<1x128xf32> to vector<8x128xf32>
    %48 = arith.mulf %47, %5 : vector<8x128xf32>
    %49 = vector.broadcast %46 : vector<1x128xf32> to vector<8x128xf32>
    %50 = arith.mulf %49, %3 : vector<8x128xf32>
    %51 = arith.addf %48, %50 : vector<8x128xf32>
    %52 = tpu.concatenate %30, %37, %44, %51 in 0 : vector<8x128xf32>, vector<8x128xf32>, vector<8x128xf32>, vector<8x128xf32> -> vector<32x128xf32>
    %c0_22 = arith.constant 0 : index
    %c0_23 = arith.constant 0 : index
    %c0_24 = arith.constant 0 : index
    %c0_25 = arith.constant 0 : index
    %53 = vector.load %arg7[%c0_22, %c0_23, %c0_24, %c0_25] : memref<2x2x32x32xf32, #tpu.memory_space<vmem>>, vector<1x1x32x32xf32>
    %54 = vector.shape_cast %53 : vector<1x1x32x32xf32> to vector<32x32xf32>
    %cst = arith.constant dense<0.000000e+00> : vector<32x128xf32>
    %55 = tpu.matmul %54, %52, %cst {dimension_numbers = #tpu.dot_dimension_numbers<[1], [0], [0], [1], [0, 0, 1, 1], [], []>} : vector<32x32xf32>, vector<32x128xf32>, vector<32x128xf32> -> vector<32x128xf32>
    %c0_26 = arith.constant 0 : index
    %c1_27 = arith.constant 1 : index
    %c0_28 = arith.constant 0 : index
    %c0_29 = arith.constant 0 : index
    %56 = vector.load %arg5[%c0_26, %c1_27, %c0_28, %c0_29] : memref<2x2x2x128xf32, #tpu.memory_space<vmem>>, vector<1x1x2x128xf32>
    %57 = vector.shape_cast %56 : vector<1x1x2x128xf32> to vector<2x128xf32>
    %c0_30 = arith.constant 0 : index
    %c1_31 = arith.constant 1 : index
    %c0_32 = arith.constant 0 : index
    %c0_33 = arith.constant 0 : index
    %58 = vector.load %arg6[%c0_30, %c1_31, %c0_32, %c0_33] : memref<2x2x2x128xf32, #tpu.memory_space<vmem>>, vector<1x1x2x128xf32>
    %59 = vector.shape_cast %58 : vector<1x1x2x128xf32> to vector<2x128xf32>
    %60 = vector.extract_strided_slice %57 {offsets = [0, 0], sizes = [1, 128], strides = [1, 1]} : vector<2x128xf32> to vector<1x128xf32>
    %61 = vector.extract_strided_slice %59 {offsets = [0, 0], sizes = [1, 128], strides = [1, 1]} : vector<2x128xf32> to vector<1x128xf32>
    %62 = vector.broadcast %60 : vector<1x128xf32> to vector<8x128xf32>
    %63 = arith.mulf %62, %14 : vector<8x128xf32>
    %64 = vector.broadcast %61 : vector<1x128xf32> to vector<8x128xf32>
    %65 = arith.mulf %64, %19 : vector<8x128xf32>
    %66 = arith.subf %63, %65 : vector<8x128xf32>
    %67 = vector.extract_strided_slice %57 {offsets = [1, 0], sizes = [1, 128], strides = [1, 1]} : vector<2x128xf32> to vector<1x128xf32>
    %68 = vector.extract_strided_slice %59 {offsets = [1, 0], sizes = [1, 128], strides = [1, 1]} : vector<2x128xf32> to vector<1x128xf32>
    %69 = vector.broadcast %67 : vector<1x128xf32> to vector<8x128xf32>
    %70 = arith.mulf %69, %14 : vector<8x128xf32>
    %71 = vector.broadcast %68 : vector<1x128xf32> to vector<8x128xf32>
    %72 = arith.mulf %71, %19 : vector<8x128xf32>
    %73 = arith.subf %70, %72 : vector<8x128xf32>
    %74 = vector.extract_strided_slice %57 {offsets = [0, 0], sizes = [1, 128], strides = [1, 1]} : vector<2x128xf32> to vector<1x128xf32>
    %75 = vector.extract_strided_slice %59 {offsets = [0, 0], sizes = [1, 128], strides = [1, 1]} : vector<2x128xf32> to vector<1x128xf32>
    %76 = vector.broadcast %74 : vector<1x128xf32> to vector<8x128xf32>
    %77 = arith.mulf %76, %19 : vector<8x128xf32>
    %78 = vector.broadcast %75 : vector<1x128xf32> to vector<8x128xf32>
    %79 = arith.mulf %78, %14 : vector<8x128xf32>
    %80 = arith.addf %77, %79 : vector<8x128xf32>
    %81 = vector.extract_strided_slice %57 {offsets = [1, 0], sizes = [1, 128], strides = [1, 1]} : vector<2x128xf32> to vector<1x128xf32>
    %82 = vector.extract_strided_slice %59 {offsets = [1, 0], sizes = [1, 128], strides = [1, 1]} : vector<2x128xf32> to vector<1x128xf32>
    %83 = vector.broadcast %81 : vector<1x128xf32> to vector<8x128xf32>
    %84 = arith.mulf %83, %19 : vector<8x128xf32>
    %85 = vector.broadcast %82 : vector<1x128xf32> to vector<8x128xf32>
    %86 = arith.mulf %85, %14 : vector<8x128xf32>
    %87 = arith.addf %84, %86 : vector<8x128xf32>
    %88 = tpu.concatenate %66, %73, %80, %87 in 0 : vector<8x128xf32>, vector<8x128xf32>, vector<8x128xf32>, vector<8x128xf32> -> vector<32x128xf32>
    %c0_34 = arith.constant 0 : index
    %c1_35 = arith.constant 1 : index
    %c0_36 = arith.constant 0 : index
    %c0_37 = arith.constant 0 : index
    %89 = vector.load %arg7[%c0_34, %c1_35, %c0_36, %c0_37] : memref<2x2x32x32xf32, #tpu.memory_space<vmem>>, vector<1x1x32x32xf32>
    %90 = vector.shape_cast %89 : vector<1x1x32x32xf32> to vector<32x32xf32>
    %cst_38 = arith.constant dense<0.000000e+00> : vector<32x128xf32>
    %91 = tpu.matmul %90, %88, %cst_38 {dimension_numbers = #tpu.dot_dimension_numbers<[1], [0], [0], [1], [0, 0, 1, 1], [], []>} : vector<32x32xf32>, vector<32x128xf32>, vector<32x128xf32> -> vector<32x128xf32>
    %92 = arith.addf %55, %91 : vector<32x128xf32>
    %c1_39 = arith.constant 1 : index
    %c0_40 = arith.constant 0 : index
    %c0_41 = arith.constant 0 : index
    %c0_42 = arith.constant 0 : index
    %93 = vector.load %arg5[%c1_39, %c0_40, %c0_41, %c0_42] : memref<2x2x2x128xf32, #tpu.memory_space<vmem>>, vector<1x1x2x128xf32>
    %94 = vector.shape_cast %93 : vector<1x1x2x128xf32> to vector<2x128xf32>
    %c1_43 = arith.constant 1 : index
    %c0_44 = arith.constant 0 : index
    %c0_45 = arith.constant 0 : index
    %c0_46 = arith.constant 0 : index
    %95 = vector.load %arg6[%c1_43, %c0_44, %c0_45, %c0_46] : memref<2x2x2x128xf32, #tpu.memory_space<vmem>>, vector<1x1x2x128xf32>
    %96 = vector.shape_cast %95 : vector<1x1x2x128xf32> to vector<2x128xf32>
    %97 = vector.extract_strided_slice %94 {offsets = [0, 0], sizes = [1, 128], strides = [1, 1]} : vector<2x128xf32> to vector<1x128xf32>
    %98 = vector.extract_strided_slice %96 {offsets = [0, 0], sizes = [1, 128], strides = [1, 1]} : vector<2x128xf32> to vector<1x128xf32>
    %99 = vector.broadcast %97 : vector<1x128xf32> to vector<8x128xf32>
    %100 = arith.mulf %99, %3 : vector<8x128xf32>
    %101 = vector.broadcast %98 : vector<1x128xf32> to vector<8x128xf32>
    %102 = arith.mulf %101, %5 : vector<8x128xf32>
    %103 = arith.subf %100, %102 : vector<8x128xf32>
    %104 = vector.extract_strided_slice %94 {offsets = [1, 0], sizes = [1, 128], strides = [1, 1]} : vector<2x128xf32> to vector<1x128xf32>
    %105 = vector.extract_strided_slice %96 {offsets = [1, 0], sizes = [1, 128], strides = [1, 1]} : vector<2x128xf32> to vector<1x128xf32>
    %106 = vector.broadcast %104 : vector<1x128xf32> to vector<8x128xf32>
    %107 = arith.mulf %106, %3 : vector<8x128xf32>
    %108 = vector.broadcast %105 : vector<1x128xf32> to vector<8x128xf32>
    %109 = arith.mulf %108, %5 : vector<8x128xf32>
    %110 = arith.subf %107, %109 : vector<8x128xf32>
    %111 = vector.extract_strided_slice %94 {offsets = [0, 0], sizes = [1, 128], strides = [1, 1]} : vector<2x128xf32> to vector<1x128xf32>
    %112 = vector.extract_strided_slice %96 {offsets = [0, 0], sizes = [1, 128], strides = [1, 1]} : vector<2x128xf32> to vector<1x128xf32>
    %113 = vector.broadcast %111 : vector<1x128xf32> to vector<8x128xf32>
    %114 = arith.mulf %113, %5 : vector<8x128xf32>
    %115 = vector.broadcast %112 : vector<1x128xf32> to vector<8x128xf32>
    %116 = arith.mulf %115, %3 : vector<8x128xf32>
    %117 = arith.addf %114, %116 : vector<8x128xf32>
    %118 = vector.extract_strided_slice %94 {offsets = [1, 0], sizes = [1, 128], strides = [1, 1]} : vector<2x128xf32> to vector<1x128xf32>
    %119 = vector.extract_strided_slice %96 {offsets = [1, 0], sizes = [1, 128], strides = [1, 1]} : vector<2x128xf32> to vector<1x128xf32>
    %120 = vector.broadcast %118 : vector<1x128xf32> to vector<8x128xf32>
    %121 = arith.mulf %120, %5 : vector<8x128xf32>
    %122 = vector.broadcast %119 : vector<1x128xf32> to vector<8x128xf32>
    %123 = arith.mulf %122, %3 : vector<8x128xf32>
    %124 = arith.addf %121, %123 : vector<8x128xf32>
    %125 = tpu.concatenate %103, %110, %117, %124 in 0 : vector<8x128xf32>, vector<8x128xf32>, vector<8x128xf32>, vector<8x128xf32> -> vector<32x128xf32>
    %c1_47 = arith.constant 1 : index
    %c0_48 = arith.constant 0 : index
    %c0_49 = arith.constant 0 : index
    %c0_50 = arith.constant 0 : index
    %126 = vector.load %arg7[%c1_47, %c0_48, %c0_49, %c0_50] : memref<2x2x32x32xf32, #tpu.memory_space<vmem>>, vector<1x1x32x32xf32>
    %127 = vector.shape_cast %126 : vector<1x1x32x32xf32> to vector<32x32xf32>
    %cst_51 = arith.constant dense<0.000000e+00> : vector<32x128xf32>
    %128 = tpu.matmul %127, %125, %cst_51 {dimension_numbers = #tpu.dot_dimension_numbers<[1], [0], [0], [1], [0, 0, 1, 1], [], []>} : vector<32x32xf32>, vector<32x128xf32>, vector<32x128xf32> -> vector<32x128xf32>
    %c1_52 = arith.constant 1 : index
    %c1_53 = arith.constant 1 : index
    %c0_54 = arith.constant 0 : index
    %c0_55 = arith.constant 0 : index
    %129 = vector.load %arg5[%c1_52, %c1_53, %c0_54, %c0_55] : memref<2x2x2x128xf32, #tpu.memory_space<vmem>>, vector<1x1x2x128xf32>
    %130 = vector.shape_cast %129 : vector<1x1x2x128xf32> to vector<2x128xf32>
    %c1_56 = arith.constant 1 : index
    %c1_57 = arith.constant 1 : index
    %c0_58 = arith.constant 0 : index
    %c0_59 = arith.constant 0 : index
    %131 = vector.load %arg6[%c1_56, %c1_57, %c0_58, %c0_59] : memref<2x2x2x128xf32, #tpu.memory_space<vmem>>, vector<1x1x2x128xf32>
    %132 = vector.shape_cast %131 : vector<1x1x2x128xf32> to vector<2x128xf32>
    %133 = vector.extract_strided_slice %130 {offsets = [0, 0], sizes = [1, 128], strides = [1, 1]} : vector<2x128xf32> to vector<1x128xf32>
    %134 = vector.extract_strided_slice %132 {offsets = [0, 0], sizes = [1, 128], strides = [1, 1]} : vector<2x128xf32> to vector<1x128xf32>
    %135 = vector.broadcast %133 : vector<1x128xf32> to vector<8x128xf32>
    %136 = arith.mulf %135, %14 : vector<8x128xf32>
    %137 = vector.broadcast %134 : vector<1x128xf32> to vector<8x128xf32>
    %138 = arith.mulf %137, %19 : vector<8x128xf32>
    %139 = arith.subf %136, %138 : vector<8x128xf32>
    %140 = vector.extract_strided_slice %130 {offsets = [1, 0], sizes = [1, 128], strides = [1, 1]} : vector<2x128xf32> to vector<1x128xf32>
    %141 = vector.extract_strided_slice %132 {offsets = [1, 0], sizes = [1, 128], strides = [1, 1]} : vector<2x128xf32> to vector<1x128xf32>
    %142 = vector.broadcast %140 : vector<1x128xf32> to vector<8x128xf32>
    %143 = arith.mulf %142, %14 : vector<8x128xf32>
    %144 = vector.broadcast %141 : vector<1x128xf32> to vector<8x128xf32>
    %145 = arith.mulf %144, %19 : vector<8x128xf32>
    %146 = arith.subf %143, %145 : vector<8x128xf32>
    %147 = vector.extract_strided_slice %130 {offsets = [0, 0], sizes = [1, 128], strides = [1, 1]} : vector<2x128xf32> to vector<1x128xf32>
    %148 = vector.extract_strided_slice %132 {offsets = [0, 0], sizes = [1, 128], strides = [1, 1]} : vector<2x128xf32> to vector<1x128xf32>
    %149 = vector.broadcast %147 : vector<1x128xf32> to vector<8x128xf32>
    %150 = arith.mulf %149, %19 : vector<8x128xf32>
    %151 = vector.broadcast %148 : vector<1x128xf32> to vector<8x128xf32>
    %152 = arith.mulf %151, %14 : vector<8x128xf32>
    %153 = arith.addf %150, %152 : vector<8x128xf32>
    %154 = vector.extract_strided_slice %130 {offsets = [1, 0], sizes = [1, 128], strides = [1, 1]} : vector<2x128xf32> to vector<1x128xf32>
    %155 = vector.extract_strided_slice %132 {offsets = [1, 0], sizes = [1, 128], strides = [1, 1]} : vector<2x128xf32> to vector<1x128xf32>
    %156 = vector.broadcast %154 : vector<1x128xf32> to vector<8x128xf32>
    %157 = arith.mulf %156, %19 : vector<8x128xf32>
    %158 = vector.broadcast %155 : vector<1x128xf32> to vector<8x128xf32>
    %159 = arith.mulf %158, %14 : vector<8x128xf32>
    %160 = arith.addf %157, %159 : vector<8x128xf32>
    %161 = tpu.concatenate %139, %146, %153, %160 in 0 : vector<8x128xf32>, vector<8x128xf32>, vector<8x128xf32>, vector<8x128xf32> -> vector<32x128xf32>
    %c1_60 = arith.constant 1 : index
    %c1_61 = arith.constant 1 : index
    %c0_62 = arith.constant 0 : index
    %c0_63 = arith.constant 0 : index
    %162 = vector.load %arg7[%c1_60, %c1_61, %c0_62, %c0_63] : memref<2x2x32x32xf32, #tpu.memory_space<vmem>>, vector<1x1x32x32xf32>
    %163 = vector.shape_cast %162 : vector<1x1x32x32xf32> to vector<32x32xf32>
    %cst_64 = arith.constant dense<0.000000e+00> : vector<32x128xf32>
    %164 = tpu.matmul %163, %161, %cst_64 {dimension_numbers = #tpu.dot_dimension_numbers<[1], [0], [0], [1], [0, 0, 1, 1], [], []>} : vector<32x32xf32>, vector<32x128xf32>, vector<32x128xf32> -> vector<32x128xf32>
    %165 = arith.addf %128, %164 : vector<32x128xf32>
    %166 = tpu.concatenate %92, %165 in 0 : vector<32x128xf32>, vector<32x128xf32> -> vector<64x128xf32>
    %c0_65 = arith.constant 0 : index
    %c0_66 = arith.constant 0 : index
    %167 = vector.load %arg8[%c0_65, %c0_66] : memref<64x128xf32, #tpu.memory_space<vmem>>, vector<64x128xf32>
    tpu.vector_store %arg8[%c0_65, %c0_66], %166 {strides = array<i32>} : memref<64x128xf32, #tpu.memory_space<vmem>>, vector<64x128xf32>,
    return
  }
  func.func @transform_0(%arg0: i32) -> (i32, i32, i32) {
    %c0_i32 = arith.constant 0 : i32
    %c0_i32_0 = arith.constant 0 : i32
    %c0_i32_1 = arith.constant 0 : i32
    return %c0_i32, %c0_i32_0, %arg0 : i32, i32, i32
  }
  func.func @transform_1(%arg0: i32) -> (i32, i32, i32) {
    %c0_i32 = arith.constant 0 : i32
    %c0_i32_0 = arith.constant 0 : i32
    %c0_i32_1 = arith.constant 0 : i32
    return %c0_i32, %c0_i32_0, %arg0 : i32, i32, i32
  }
  func.func @transform_2(%arg0: i32) -> (i32, i32) {
    %c0_i32 = arith.constant 0 : i32
    %c0_i32_0 = arith.constant 0 : i32
    return %c0_i32, %arg0 : i32, i32
  }
  func.func @transform_3(%arg0: i32) -> (i32, i32) {
    %c0_i32 = arith.constant 0 : i32
    %c0_i32_0 = arith.constant 0 : i32
    return %c0_i32, %arg0 : i32, i32
  }
  func.func @transform_4(%arg0: i32) -> (i32, i32, i32, i32) {
    %c0_i32 = arith.constant 0 : i32
    %c0_i32_0 = arith.constant 0 : i32
    %c0_i32_1 = arith.constant 0 : i32
    %c0_i32_2 = arith.constant 0 : i32
    return %c0_i32, %c0_i32_0, %c0_i32_1, %arg0 : i32, i32, i32, i32
  }
  func.func @transform_5(%arg0: i32) -> (i32, i32, i32, i32) {
    %c0_i32 = arith.constant 0 : i32
    %c0_i32_0 = arith.constant 0 : i32
    %c0_i32_1 = arith.constant 0 : i32
    %c0_i32_2 = arith.constant 0 : i32
    return %c0_i32, %c0_i32_0, %c0_i32_1, %arg0 : i32, i32, i32, i32
  }
  func.func @transform_6(%arg0: i32) -> (i32, i32, i32, i32) {
    %c0_i32 = arith.constant 0 : i32
    %c0_i32_0 = arith.constant 0 : i32
    %c0_i32_1 = arith.constant 0 : i32
    %c0_i32_2 = arith.constant 0 : i32
    %c0_i32_3 = arith.constant 0 : i32
    return %c0_i32, %c0_i32_0, %c0_i32_1, %c0_i32_2 : i32, i32, i32, i32
  }
  func.func @transform_7(%arg0: i32) -> (i32, i32) {
    %c0_i32 = arith.constant 0 : i32
    %c0_i32_0 = arith.constant 0 : i32
    return %c0_i32, %arg0 : i32, i32
  }
}

module attributes {stable_mosaic.version = 11 : i64} {
  func.func @_nonlin_kernel(%arg0: i32, %arg1: memref<64x16xf32, #tpu.memory_space<vmem>>, %arg2: memref<64x16xf32, #tpu.memory_space<vmem>>, %arg3: memref<1x16xf32, #tpu.memory_space<vmem>>, %arg4: memref<64x16xf32, #tpu.memory_space<vmem>>, %arg5: memref<64x16xf32, #tpu.memory_space<vmem>>) attributes {dimension_semantics = [#tpu.dimension_semantics<parallel>], iteration_bounds = array<i64: 1>, scalar_prefetch = 0 : i64, scratch_operands = 0 : i64, tpu.core_type = #tpu.core_type<tc>, window_params = [{transform_indices = @transform_0, window_bounds = array<i64: 64, 16>}, {transform_indices = @transform_1, window_bounds = array<i64: 64, 16>}, {pipeline_mode = #tpu.pipeline_mode<synchronous>, transform_indices = @transform_2, window_bounds = array<i64: 1, 16>}, {transform_indices = @transform_3, window_bounds = array<i64: 64, 16>}, {transform_indices = @transform_4, window_bounds = array<i64: 64, 16>}]} {
    %c0 = arith.constant 0 : index
    %c0_0 = arith.constant 0 : index
    %0 = vector.load %arg1[%c0, %c0_0] : memref<64x16xf32, #tpu.memory_space<vmem>>, vector<64x16xf32>
    %c0_1 = arith.constant 0 : index
    %c0_2 = arith.constant 0 : index
    %1 = vector.load %arg2[%c0_1, %c0_2] : memref<64x16xf32, #tpu.memory_space<vmem>>, vector<64x16xf32>
    %c0_3 = arith.constant 0 : index
    %c0_4 = arith.constant 0 : index
    %2 = vector.load %arg3[%c0_3, %c0_4] : memref<1x16xf32, #tpu.memory_space<vmem>>, vector<1x16xf32>
    %3 = arith.mulf %0, %0 : vector<64x16xf32>
    %4 = arith.mulf %1, %1 : vector<64x16xf32>
    %5 = arith.addf %3, %4 : vector<64x16xf32>
    %cst = arith.constant 9.99999996E-13 : f32
    %6 = vector.broadcast %cst : f32 to vector<64x16xf32>
    %7 = arith.maximumf %5, %6 : vector<64x16xf32>
    %8 = math.rsqrt %7 : vector<64x16xf32>
    %9 = arith.mulf %7, %8 : vector<64x16xf32>
    %10 = vector.broadcast %2 : vector<1x16xf32> to vector<64x16xf32>
    %11 = arith.addf %9, %10 : vector<64x16xf32>
    %cst_5 = arith.constant 0.000000e+00 : f32
    %12 = vector.broadcast %cst_5 : f32 to vector<64x16xf32>
    %13 = arith.maximumf %11, %12 : vector<64x16xf32>
    %14 = arith.mulf %13, %8 : vector<64x16xf32>
    %15 = arith.mulf %14, %0 : vector<64x16xf32>
    %c0_6 = arith.constant 0 : index
    %c0_7 = arith.constant 0 : index
    %16 = vector.load %arg4[%c0_6, %c0_7] : memref<64x16xf32, #tpu.memory_space<vmem>>, vector<64x16xf32>
    tpu.vector_store %arg4[%c0_6, %c0_7], %15 {strides = array<i32>} : memref<64x16xf32, #tpu.memory_space<vmem>>, vector<64x16xf32>,
    %17 = arith.mulf %14, %1 : vector<64x16xf32>
    %c0_8 = arith.constant 0 : index
    %c0_9 = arith.constant 0 : index
    %18 = vector.load %arg5[%c0_8, %c0_9] : memref<64x16xf32, #tpu.memory_space<vmem>>, vector<64x16xf32>
    tpu.vector_store %arg5[%c0_8, %c0_9], %17 {strides = array<i32>} : memref<64x16xf32, #tpu.memory_space<vmem>>, vector<64x16xf32>,
    return
  }
  func.func @transform_0(%arg0: i32) -> (i32, i32) {
    %c0_i32 = arith.constant 0 : i32
    %c0_i32_0 = arith.constant 0 : i32
    return %arg0, %c0_i32 : i32, i32
  }
  func.func @transform_1(%arg0: i32) -> (i32, i32) {
    %c0_i32 = arith.constant 0 : i32
    %c0_i32_0 = arith.constant 0 : i32
    return %arg0, %c0_i32 : i32, i32
  }
  func.func @transform_2(%arg0: i32) -> (i32, i32) {
    %c0_i32 = arith.constant 0 : i32
    %c0_i32_0 = arith.constant 0 : i32
    %c0_i32_1 = arith.constant 0 : i32
    return %c0_i32, %c0_i32_0 : i32, i32
  }
  func.func @transform_3(%arg0: i32) -> (i32, i32) {
    %c0_i32 = arith.constant 0 : i32
    %c0_i32_0 = arith.constant 0 : i32
    return %arg0, %c0_i32 : i32, i32
  }
  func.func @transform_4(%arg0: i32) -> (i32, i32) {
    %c0_i32 = arith.constant 0 : i32
    %c0_i32_0 = arith.constant 0 : i32
    return %arg0, %c0_i32 : i32, i32
  }
}

module attributes {stable_mosaic.version = 11 : i64} {
  func.func @_lin_res_nonlin_kernel(%arg0: i32, %arg1: memref<64x16xf32, #tpu.memory_space<vmem>>, %arg2: memref<64x16xf32, #tpu.memory_space<vmem>>, %arg3: memref<64x8xf32, #tpu.memory_space<vmem>>, %arg4: memref<64x8xf32, #tpu.memory_space<vmem>>, %arg5: memref<8x16xf32, #tpu.memory_space<vmem>>, %arg6: memref<1x16xf32, #tpu.memory_space<vmem>>, %arg7: memref<1x16xf32, #tpu.memory_space<vmem>>, %arg8: memref<64x16xf32, #tpu.memory_space<vmem>>, %arg9: memref<64x16xf32, #tpu.memory_space<vmem>>) attributes {dimension_semantics = [#tpu.dimension_semantics<parallel>], iteration_bounds = array<i64: 1>, scalar_prefetch = 0 : i64, scratch_operands = 0 : i64, tpu.core_type = #tpu.core_type<tc>, window_params = [{transform_indices = @transform_0, window_bounds = array<i64: 64, 16>}, {transform_indices = @transform_1, window_bounds = array<i64: 64, 16>}, {transform_indices = @transform_2, window_bounds = array<i64: 64, 8>}, {transform_indices = @transform_3, window_bounds = array<i64: 64, 8>}, {pipeline_mode = #tpu.pipeline_mode<synchronous>, transform_indices = @transform_4, window_bounds = array<i64: 8, 16>}, {pipeline_mode = #tpu.pipeline_mode<synchronous>, transform_indices = @transform_5, window_bounds = array<i64: 1, 16>}, {pipeline_mode = #tpu.pipeline_mode<synchronous>, transform_indices = @transform_6, window_bounds = array<i64: 1, 16>}, {transform_indices = @transform_7, window_bounds = array<i64: 64, 16>}, {transform_indices = @transform_8, window_bounds = array<i64: 64, 16>}]} {
    %c0 = arith.constant 0 : index
    %c0_0 = arith.constant 0 : index
    %0 = vector.load %arg5[%c0, %c0_0] : memref<8x16xf32, #tpu.memory_space<vmem>>, vector<8x16xf32>
    %c0_1 = arith.constant 0 : index
    %c0_2 = arith.constant 0 : index
    %1 = vector.load %arg6[%c0_1, %c0_2] : memref<1x16xf32, #tpu.memory_space<vmem>>, vector<1x16xf32>
    %c0_3 = arith.constant 0 : index
    %c0_4 = arith.constant 0 : index
    %2 = vector.load %arg1[%c0_3, %c0_4] : memref<64x16xf32, #tpu.memory_space<vmem>>, vector<64x16xf32>
    %c0_5 = arith.constant 0 : index
    %c0_6 = arith.constant 0 : index
    %3 = vector.load %arg3[%c0_5, %c0_6] : memref<64x8xf32, #tpu.memory_space<vmem>>, vector<64x8xf32>
    %cst = arith.constant dense<0.000000e+00> : vector<64x16xf32>
    %4 = tpu.matmul %3, %0, %cst {dimension_numbers = #tpu.dot_dimension_numbers<[1], [0], [0], [1], [0, 0, 1, 1], [], []>} : vector<64x8xf32>, vector<8x16xf32>, vector<64x16xf32> -> vector<64x16xf32>
    %5 = arith.addf %2, %4 : vector<64x16xf32>
    %6 = vector.broadcast %1 : vector<1x16xf32> to vector<64x16xf32>
    %7 = arith.addf %5, %6 : vector<64x16xf32>
    %c0_7 = arith.constant 0 : index
    %c0_8 = arith.constant 0 : index
    %8 = vector.load %arg2[%c0_7, %c0_8] : memref<64x16xf32, #tpu.memory_space<vmem>>, vector<64x16xf32>
    %c0_9 = arith.constant 0 : index
    %c0_10 = arith.constant 0 : index
    %9 = vector.load %arg4[%c0_9, %c0_10] : memref<64x8xf32, #tpu.memory_space<vmem>>, vector<64x8xf32>
    %cst_11 = arith.constant dense<0.000000e+00> : vector<64x16xf32>
    %10 = tpu.matmul %9, %0, %cst_11 {dimension_numbers = #tpu.dot_dimension_numbers<[1], [0], [0], [1], [0, 0, 1, 1], [], []>} : vector<64x8xf32>, vector<8x16xf32>, vector<64x16xf32> -> vector<64x16xf32>
    %11 = arith.addf %8, %10 : vector<64x16xf32>
    %12 = vector.broadcast %1 : vector<1x16xf32> to vector<64x16xf32>
    %13 = arith.addf %11, %12 : vector<64x16xf32>
    %c0_12 = arith.constant 0 : index
    %c0_13 = arith.constant 0 : index
    %14 = vector.load %arg7[%c0_12, %c0_13] : memref<1x16xf32, #tpu.memory_space<vmem>>, vector<1x16xf32>
    %15 = arith.mulf %7, %7 : vector<64x16xf32>
    %16 = arith.mulf %13, %13 : vector<64x16xf32>
    %17 = arith.addf %15, %16 : vector<64x16xf32>
    %cst_14 = arith.constant 9.99999996E-13 : f32
    %18 = vector.broadcast %cst_14 : f32 to vector<64x16xf32>
    %19 = arith.maximumf %17, %18 : vector<64x16xf32>
    %20 = math.rsqrt %19 : vector<64x16xf32>
    %21 = arith.mulf %19, %20 : vector<64x16xf32>
    %22 = vector.broadcast %14 : vector<1x16xf32> to vector<64x16xf32>
    %23 = arith.addf %21, %22 : vector<64x16xf32>
    %cst_15 = arith.constant 0.000000e+00 : f32
    %24 = vector.broadcast %cst_15 : f32 to vector<64x16xf32>
    %25 = arith.maximumf %23, %24 : vector<64x16xf32>
    %26 = arith.mulf %25, %20 : vector<64x16xf32>
    %27 = arith.mulf %26, %7 : vector<64x16xf32>
    %c0_16 = arith.constant 0 : index
    %c0_17 = arith.constant 0 : index
    %28 = vector.load %arg8[%c0_16, %c0_17] : memref<64x16xf32, #tpu.memory_space<vmem>>, vector<64x16xf32>
    tpu.vector_store %arg8[%c0_16, %c0_17], %27 {strides = array<i32>} : memref<64x16xf32, #tpu.memory_space<vmem>>, vector<64x16xf32>,
    %29 = arith.mulf %26, %13 : vector<64x16xf32>
    %c0_18 = arith.constant 0 : index
    %c0_19 = arith.constant 0 : index
    %30 = vector.load %arg9[%c0_18, %c0_19] : memref<64x16xf32, #tpu.memory_space<vmem>>, vector<64x16xf32>
    tpu.vector_store %arg9[%c0_18, %c0_19], %29 {strides = array<i32>} : memref<64x16xf32, #tpu.memory_space<vmem>>, vector<64x16xf32>,
    return
  }
  func.func @transform_0(%arg0: i32) -> (i32, i32) {
    %c0_i32 = arith.constant 0 : i32
    %c0_i32_0 = arith.constant 0 : i32
    return %arg0, %c0_i32 : i32, i32
  }
  func.func @transform_1(%arg0: i32) -> (i32, i32) {
    %c0_i32 = arith.constant 0 : i32
    %c0_i32_0 = arith.constant 0 : i32
    return %arg0, %c0_i32 : i32, i32
  }
  func.func @transform_2(%arg0: i32) -> (i32, i32) {
    %c0_i32 = arith.constant 0 : i32
    %c0_i32_0 = arith.constant 0 : i32
    return %arg0, %c0_i32 : i32, i32
  }
  func.func @transform_3(%arg0: i32) -> (i32, i32) {
    %c0_i32 = arith.constant 0 : i32
    %c0_i32_0 = arith.constant 0 : i32
    return %arg0, %c0_i32 : i32, i32
  }
  func.func @transform_4(%arg0: i32) -> (i32, i32) {
    %c0_i32 = arith.constant 0 : i32
    %c0_i32_0 = arith.constant 0 : i32
    %c0_i32_1 = arith.constant 0 : i32
    return %c0_i32, %c0_i32_0 : i32, i32
  }
  func.func @transform_5(%arg0: i32) -> (i32, i32) {
    %c0_i32 = arith.constant 0 : i32
    %c0_i32_0 = arith.constant 0 : i32
    %c0_i32_1 = arith.constant 0 : i32
    return %c0_i32, %c0_i32_0 : i32, i32
  }
  func.func @transform_6(%arg0: i32) -> (i32, i32) {
    %c0_i32 = arith.constant 0 : i32
    %c0_i32_0 = arith.constant 0 : i32
    %c0_i32_1 = arith.constant 0 : i32
    return %c0_i32, %c0_i32_0 : i32, i32
  }
  func.func @transform_7(%arg0: i32) -> (i32, i32) {
    %c0_i32 = arith.constant 0 : i32
    %c0_i32_0 = arith.constant 0 : i32
    return %arg0, %c0_i32 : i32, i32
  }
  func.func @transform_8(%arg0: i32) -> (i32, i32) {
    %c0_i32 = arith.constant 0 : i32
    %c0_i32_0 = arith.constant 0 : i32
    return %arg0, %c0_i32 : i32, i32
  }
}

module attributes {stable_mosaic.version = 11 : i64} {
  func.func @_harmonic_conv_kernel(%arg0: i32, %arg1: memref<2x16x128xf32, #tpu.memory_space<vmem>>, %arg2: memref<2x16x128xf32, #tpu.memory_space<vmem>>, %arg3: memref<1x128xf32, #tpu.memory_space<vmem>>, %arg4: memref<1x128xf32, #tpu.memory_space<vmem>>, %arg5: memref<2x2x2x128xf32, #tpu.memory_space<vmem>>, %arg6: memref<2x2x2x128xf32, #tpu.memory_space<vmem>>, %arg7: memref<2x2x32x64xf32, #tpu.memory_space<vmem>>, %arg8: memref<64x128xf32, #tpu.memory_space<vmem>>) attributes {dimension_semantics = [#tpu.dimension_semantics<parallel>], iteration_bounds = array<i64: 1>, scalar_prefetch = 0 : i64, scratch_operands = 0 : i64, tpu.core_type = #tpu.core_type<tc>, window_params = [{transform_indices = @transform_0, window_bounds = array<i64: 2, 16, 128>}, {transform_indices = @transform_1, window_bounds = array<i64: 2, 16, 128>}, {transform_indices = @transform_2, window_bounds = array<i64: 1, 128>}, {transform_indices = @transform_3, window_bounds = array<i64: 1, 128>}, {transform_indices = @transform_4, window_bounds = array<i64: 2, 2, 2, 128>}, {transform_indices = @transform_5, window_bounds = array<i64: 2, 2, 2, 128>}, {pipeline_mode = #tpu.pipeline_mode<synchronous>, transform_indices = @transform_6, window_bounds = array<i64: 2, 2, 32, 64>}, {transform_indices = @transform_7, window_bounds = array<i64: 64, 128>}]} {
    %c0 = arith.constant 0 : index
    %c0_0 = arith.constant 0 : index
    %0 = vector.load %arg3[%c0, %c0_0] : memref<1x128xf32, #tpu.memory_space<vmem>>, vector<1x128xf32>
    %c0_1 = arith.constant 0 : index
    %c0_2 = arith.constant 0 : index
    %1 = vector.load %arg4[%c0_1, %c0_2] : memref<1x128xf32, #tpu.memory_space<vmem>>, vector<1x128xf32>
    %c0_3 = arith.constant 0 : index
    %c0_4 = arith.constant 0 : index
    %c0_5 = arith.constant 0 : index
    %2 = vector.load %arg1[%c0_3, %c0_4, %c0_5] : memref<2x16x128xf32, #tpu.memory_space<vmem>>, vector<1x16x128xf32>
    %3 = vector.shape_cast %2 : vector<1x16x128xf32> to vector<16x128xf32>
    %c0_6 = arith.constant 0 : index
    %c0_7 = arith.constant 0 : index
    %c0_8 = arith.constant 0 : index
    %4 = vector.load %arg2[%c0_6, %c0_7, %c0_8] : memref<2x16x128xf32, #tpu.memory_space<vmem>>, vector<1x16x128xf32>
    %5 = vector.shape_cast %4 : vector<1x16x128xf32> to vector<16x128xf32>
    %c1 = arith.constant 1 : index
    %c0_9 = arith.constant 0 : index
    %c0_10 = arith.constant 0 : index
    %6 = vector.load %arg1[%c1, %c0_9, %c0_10] : memref<2x16x128xf32, #tpu.memory_space<vmem>>, vector<1x16x128xf32>
    %7 = vector.shape_cast %6 : vector<1x16x128xf32> to vector<16x128xf32>
    %c1_11 = arith.constant 1 : index
    %c0_12 = arith.constant 0 : index
    %c0_13 = arith.constant 0 : index
    %8 = vector.load %arg2[%c1_11, %c0_12, %c0_13] : memref<2x16x128xf32, #tpu.memory_space<vmem>>, vector<1x16x128xf32>
    %9 = vector.shape_cast %8 : vector<1x16x128xf32> to vector<16x128xf32>
    %10 = vector.broadcast %0 : vector<1x128xf32> to vector<16x128xf32>
    %11 = arith.mulf %7, %10 : vector<16x128xf32>
    %12 = vector.broadcast %1 : vector<1x128xf32> to vector<16x128xf32>
    %13 = arith.mulf %9, %12 : vector<16x128xf32>
    %14 = arith.subf %11, %13 : vector<16x128xf32>
    %15 = vector.broadcast %1 : vector<1x128xf32> to vector<16x128xf32>
    %16 = arith.mulf %7, %15 : vector<16x128xf32>
    %17 = vector.broadcast %0 : vector<1x128xf32> to vector<16x128xf32>
    %18 = arith.mulf %9, %17 : vector<16x128xf32>
    %19 = arith.addf %16, %18 : vector<16x128xf32>
    %c0_14 = arith.constant 0 : index
    %c0_15 = arith.constant 0 : index
    %c0_16 = arith.constant 0 : index
    %c0_17 = arith.constant 0 : index
    %20 = vector.load %arg5[%c0_14, %c0_15, %c0_16, %c0_17] : memref<2x2x2x128xf32, #tpu.memory_space<vmem>>, vector<1x1x2x128xf32>
    %21 = vector.shape_cast %20 : vector<1x1x2x128xf32> to vector<2x128xf32>
    %c0_18 = arith.constant 0 : index
    %c0_19 = arith.constant 0 : index
    %c0_20 = arith.constant 0 : index
    %c0_21 = arith.constant 0 : index
    %22 = vector.load %arg6[%c0_18, %c0_19, %c0_20, %c0_21] : memref<2x2x2x128xf32, #tpu.memory_space<vmem>>, vector<1x1x2x128xf32>
    %23 = vector.shape_cast %22 : vector<1x1x2x128xf32> to vector<2x128xf32>
    %24 = vector.extract_strided_slice %21 {offsets = [0, 0], sizes = [1, 128], strides = [1, 1]} : vector<2x128xf32> to vector<1x128xf32>
    %25 = vector.extract_strided_slice %23 {offsets = [0, 0], sizes = [1, 128], strides = [1, 1]} : vector<2x128xf32> to vector<1x128xf32>
    %26 = vector.broadcast %24 : vector<1x128xf32> to vector<16x128xf32>
    %27 = arith.mulf %26, %3 : vector<16x128xf32>
    %28 = vector.broadcast %25 : vector<1x128xf32> to vector<16x128xf32>
    %29 = arith.mulf %28, %5 : vector<16x128xf32>
    %30 = arith.subf %27, %29 : vector<16x128xf32>
    %31 = vector.extract_strided_slice %21 {offsets = [1, 0], sizes = [1, 128], strides = [1, 1]} : vector<2x128xf32> to vector<1x128xf32>
    %32 = vector.extract_strided_slice %23 {offsets = [1, 0], sizes = [1, 128], strides = [1, 1]} : vector<2x128xf32> to vector<1x128xf32>
    %33 = vector.broadcast %31 : vector<1x128xf32> to vector<16x128xf32>
    %34 = arith.mulf %33, %3 : vector<16x128xf32>
    %35 = vector.broadcast %32 : vector<1x128xf32> to vector<16x128xf32>
    %36 = arith.mulf %35, %5 : vector<16x128xf32>
    %37 = arith.subf %34, %36 : vector<16x128xf32>
    %38 = vector.extract_strided_slice %21 {offsets = [0, 0], sizes = [1, 128], strides = [1, 1]} : vector<2x128xf32> to vector<1x128xf32>
    %39 = vector.extract_strided_slice %23 {offsets = [0, 0], sizes = [1, 128], strides = [1, 1]} : vector<2x128xf32> to vector<1x128xf32>
    %40 = vector.broadcast %38 : vector<1x128xf32> to vector<16x128xf32>
    %41 = arith.mulf %40, %5 : vector<16x128xf32>
    %42 = vector.broadcast %39 : vector<1x128xf32> to vector<16x128xf32>
    %43 = arith.mulf %42, %3 : vector<16x128xf32>
    %44 = arith.addf %41, %43 : vector<16x128xf32>
    %45 = vector.extract_strided_slice %21 {offsets = [1, 0], sizes = [1, 128], strides = [1, 1]} : vector<2x128xf32> to vector<1x128xf32>
    %46 = vector.extract_strided_slice %23 {offsets = [1, 0], sizes = [1, 128], strides = [1, 1]} : vector<2x128xf32> to vector<1x128xf32>
    %47 = vector.broadcast %45 : vector<1x128xf32> to vector<16x128xf32>
    %48 = arith.mulf %47, %5 : vector<16x128xf32>
    %49 = vector.broadcast %46 : vector<1x128xf32> to vector<16x128xf32>
    %50 = arith.mulf %49, %3 : vector<16x128xf32>
    %51 = arith.addf %48, %50 : vector<16x128xf32>
    %52 = tpu.concatenate %30, %37, %44, %51 in 0 : vector<16x128xf32>, vector<16x128xf32>, vector<16x128xf32>, vector<16x128xf32> -> vector<64x128xf32>
    %c0_22 = arith.constant 0 : index
    %c0_23 = arith.constant 0 : index
    %c0_24 = arith.constant 0 : index
    %c0_25 = arith.constant 0 : index
    %53 = vector.load %arg7[%c0_22, %c0_23, %c0_24, %c0_25] : memref<2x2x32x64xf32, #tpu.memory_space<vmem>>, vector<1x1x32x64xf32>
    %54 = vector.shape_cast %53 : vector<1x1x32x64xf32> to vector<32x64xf32>
    %cst = arith.constant dense<0.000000e+00> : vector<32x128xf32>
    %55 = tpu.matmul %54, %52, %cst {dimension_numbers = #tpu.dot_dimension_numbers<[1], [0], [0], [1], [0, 0, 1, 1], [], []>} : vector<32x64xf32>, vector<64x128xf32>, vector<32x128xf32> -> vector<32x128xf32>
    %c0_26 = arith.constant 0 : index
    %c1_27 = arith.constant 1 : index
    %c0_28 = arith.constant 0 : index
    %c0_29 = arith.constant 0 : index
    %56 = vector.load %arg5[%c0_26, %c1_27, %c0_28, %c0_29] : memref<2x2x2x128xf32, #tpu.memory_space<vmem>>, vector<1x1x2x128xf32>
    %57 = vector.shape_cast %56 : vector<1x1x2x128xf32> to vector<2x128xf32>
    %c0_30 = arith.constant 0 : index
    %c1_31 = arith.constant 1 : index
    %c0_32 = arith.constant 0 : index
    %c0_33 = arith.constant 0 : index
    %58 = vector.load %arg6[%c0_30, %c1_31, %c0_32, %c0_33] : memref<2x2x2x128xf32, #tpu.memory_space<vmem>>, vector<1x1x2x128xf32>
    %59 = vector.shape_cast %58 : vector<1x1x2x128xf32> to vector<2x128xf32>
    %60 = vector.extract_strided_slice %57 {offsets = [0, 0], sizes = [1, 128], strides = [1, 1]} : vector<2x128xf32> to vector<1x128xf32>
    %61 = vector.extract_strided_slice %59 {offsets = [0, 0], sizes = [1, 128], strides = [1, 1]} : vector<2x128xf32> to vector<1x128xf32>
    %62 = vector.broadcast %60 : vector<1x128xf32> to vector<16x128xf32>
    %63 = arith.mulf %62, %14 : vector<16x128xf32>
    %64 = vector.broadcast %61 : vector<1x128xf32> to vector<16x128xf32>
    %65 = arith.mulf %64, %19 : vector<16x128xf32>
    %66 = arith.subf %63, %65 : vector<16x128xf32>
    %67 = vector.extract_strided_slice %57 {offsets = [1, 0], sizes = [1, 128], strides = [1, 1]} : vector<2x128xf32> to vector<1x128xf32>
    %68 = vector.extract_strided_slice %59 {offsets = [1, 0], sizes = [1, 128], strides = [1, 1]} : vector<2x128xf32> to vector<1x128xf32>
    %69 = vector.broadcast %67 : vector<1x128xf32> to vector<16x128xf32>
    %70 = arith.mulf %69, %14 : vector<16x128xf32>
    %71 = vector.broadcast %68 : vector<1x128xf32> to vector<16x128xf32>
    %72 = arith.mulf %71, %19 : vector<16x128xf32>
    %73 = arith.subf %70, %72 : vector<16x128xf32>
    %74 = vector.extract_strided_slice %57 {offsets = [0, 0], sizes = [1, 128], strides = [1, 1]} : vector<2x128xf32> to vector<1x128xf32>
    %75 = vector.extract_strided_slice %59 {offsets = [0, 0], sizes = [1, 128], strides = [1, 1]} : vector<2x128xf32> to vector<1x128xf32>
    %76 = vector.broadcast %74 : vector<1x128xf32> to vector<16x128xf32>
    %77 = arith.mulf %76, %19 : vector<16x128xf32>
    %78 = vector.broadcast %75 : vector<1x128xf32> to vector<16x128xf32>
    %79 = arith.mulf %78, %14 : vector<16x128xf32>
    %80 = arith.addf %77, %79 : vector<16x128xf32>
    %81 = vector.extract_strided_slice %57 {offsets = [1, 0], sizes = [1, 128], strides = [1, 1]} : vector<2x128xf32> to vector<1x128xf32>
    %82 = vector.extract_strided_slice %59 {offsets = [1, 0], sizes = [1, 128], strides = [1, 1]} : vector<2x128xf32> to vector<1x128xf32>
    %83 = vector.broadcast %81 : vector<1x128xf32> to vector<16x128xf32>
    %84 = arith.mulf %83, %19 : vector<16x128xf32>
    %85 = vector.broadcast %82 : vector<1x128xf32> to vector<16x128xf32>
    %86 = arith.mulf %85, %14 : vector<16x128xf32>
    %87 = arith.addf %84, %86 : vector<16x128xf32>
    %88 = tpu.concatenate %66, %73, %80, %87 in 0 : vector<16x128xf32>, vector<16x128xf32>, vector<16x128xf32>, vector<16x128xf32> -> vector<64x128xf32>
    %c0_34 = arith.constant 0 : index
    %c1_35 = arith.constant 1 : index
    %c0_36 = arith.constant 0 : index
    %c0_37 = arith.constant 0 : index
    %89 = vector.load %arg7[%c0_34, %c1_35, %c0_36, %c0_37] : memref<2x2x32x64xf32, #tpu.memory_space<vmem>>, vector<1x1x32x64xf32>
    %90 = vector.shape_cast %89 : vector<1x1x32x64xf32> to vector<32x64xf32>
    %cst_38 = arith.constant dense<0.000000e+00> : vector<32x128xf32>
    %91 = tpu.matmul %90, %88, %cst_38 {dimension_numbers = #tpu.dot_dimension_numbers<[1], [0], [0], [1], [0, 0, 1, 1], [], []>} : vector<32x64xf32>, vector<64x128xf32>, vector<32x128xf32> -> vector<32x128xf32>
    %92 = arith.addf %55, %91 : vector<32x128xf32>
    %c1_39 = arith.constant 1 : index
    %c0_40 = arith.constant 0 : index
    %c0_41 = arith.constant 0 : index
    %c0_42 = arith.constant 0 : index
    %93 = vector.load %arg5[%c1_39, %c0_40, %c0_41, %c0_42] : memref<2x2x2x128xf32, #tpu.memory_space<vmem>>, vector<1x1x2x128xf32>
    %94 = vector.shape_cast %93 : vector<1x1x2x128xf32> to vector<2x128xf32>
    %c1_43 = arith.constant 1 : index
    %c0_44 = arith.constant 0 : index
    %c0_45 = arith.constant 0 : index
    %c0_46 = arith.constant 0 : index
    %95 = vector.load %arg6[%c1_43, %c0_44, %c0_45, %c0_46] : memref<2x2x2x128xf32, #tpu.memory_space<vmem>>, vector<1x1x2x128xf32>
    %96 = vector.shape_cast %95 : vector<1x1x2x128xf32> to vector<2x128xf32>
    %97 = vector.extract_strided_slice %94 {offsets = [0, 0], sizes = [1, 128], strides = [1, 1]} : vector<2x128xf32> to vector<1x128xf32>
    %98 = vector.extract_strided_slice %96 {offsets = [0, 0], sizes = [1, 128], strides = [1, 1]} : vector<2x128xf32> to vector<1x128xf32>
    %99 = vector.broadcast %97 : vector<1x128xf32> to vector<16x128xf32>
    %100 = arith.mulf %99, %3 : vector<16x128xf32>
    %101 = vector.broadcast %98 : vector<1x128xf32> to vector<16x128xf32>
    %102 = arith.mulf %101, %5 : vector<16x128xf32>
    %103 = arith.subf %100, %102 : vector<16x128xf32>
    %104 = vector.extract_strided_slice %94 {offsets = [1, 0], sizes = [1, 128], strides = [1, 1]} : vector<2x128xf32> to vector<1x128xf32>
    %105 = vector.extract_strided_slice %96 {offsets = [1, 0], sizes = [1, 128], strides = [1, 1]} : vector<2x128xf32> to vector<1x128xf32>
    %106 = vector.broadcast %104 : vector<1x128xf32> to vector<16x128xf32>
    %107 = arith.mulf %106, %3 : vector<16x128xf32>
    %108 = vector.broadcast %105 : vector<1x128xf32> to vector<16x128xf32>
    %109 = arith.mulf %108, %5 : vector<16x128xf32>
    %110 = arith.subf %107, %109 : vector<16x128xf32>
    %111 = vector.extract_strided_slice %94 {offsets = [0, 0], sizes = [1, 128], strides = [1, 1]} : vector<2x128xf32> to vector<1x128xf32>
    %112 = vector.extract_strided_slice %96 {offsets = [0, 0], sizes = [1, 128], strides = [1, 1]} : vector<2x128xf32> to vector<1x128xf32>
    %113 = vector.broadcast %111 : vector<1x128xf32> to vector<16x128xf32>
    %114 = arith.mulf %113, %5 : vector<16x128xf32>
    %115 = vector.broadcast %112 : vector<1x128xf32> to vector<16x128xf32>
    %116 = arith.mulf %115, %3 : vector<16x128xf32>
    %117 = arith.addf %114, %116 : vector<16x128xf32>
    %118 = vector.extract_strided_slice %94 {offsets = [1, 0], sizes = [1, 128], strides = [1, 1]} : vector<2x128xf32> to vector<1x128xf32>
    %119 = vector.extract_strided_slice %96 {offsets = [1, 0], sizes = [1, 128], strides = [1, 1]} : vector<2x128xf32> to vector<1x128xf32>
    %120 = vector.broadcast %118 : vector<1x128xf32> to vector<16x128xf32>
    %121 = arith.mulf %120, %5 : vector<16x128xf32>
    %122 = vector.broadcast %119 : vector<1x128xf32> to vector<16x128xf32>
    %123 = arith.mulf %122, %3 : vector<16x128xf32>
    %124 = arith.addf %121, %123 : vector<16x128xf32>
    %125 = tpu.concatenate %103, %110, %117, %124 in 0 : vector<16x128xf32>, vector<16x128xf32>, vector<16x128xf32>, vector<16x128xf32> -> vector<64x128xf32>
    %c1_47 = arith.constant 1 : index
    %c0_48 = arith.constant 0 : index
    %c0_49 = arith.constant 0 : index
    %c0_50 = arith.constant 0 : index
    %126 = vector.load %arg7[%c1_47, %c0_48, %c0_49, %c0_50] : memref<2x2x32x64xf32, #tpu.memory_space<vmem>>, vector<1x1x32x64xf32>
    %127 = vector.shape_cast %126 : vector<1x1x32x64xf32> to vector<32x64xf32>
    %cst_51 = arith.constant dense<0.000000e+00> : vector<32x128xf32>
    %128 = tpu.matmul %127, %125, %cst_51 {dimension_numbers = #tpu.dot_dimension_numbers<[1], [0], [0], [1], [0, 0, 1, 1], [], []>} : vector<32x64xf32>, vector<64x128xf32>, vector<32x128xf32> -> vector<32x128xf32>
    %c1_52 = arith.constant 1 : index
    %c1_53 = arith.constant 1 : index
    %c0_54 = arith.constant 0 : index
    %c0_55 = arith.constant 0 : index
    %129 = vector.load %arg5[%c1_52, %c1_53, %c0_54, %c0_55] : memref<2x2x2x128xf32, #tpu.memory_space<vmem>>, vector<1x1x2x128xf32>
    %130 = vector.shape_cast %129 : vector<1x1x2x128xf32> to vector<2x128xf32>
    %c1_56 = arith.constant 1 : index
    %c1_57 = arith.constant 1 : index
    %c0_58 = arith.constant 0 : index
    %c0_59 = arith.constant 0 : index
    %131 = vector.load %arg6[%c1_56, %c1_57, %c0_58, %c0_59] : memref<2x2x2x128xf32, #tpu.memory_space<vmem>>, vector<1x1x2x128xf32>
    %132 = vector.shape_cast %131 : vector<1x1x2x128xf32> to vector<2x128xf32>
    %133 = vector.extract_strided_slice %130 {offsets = [0, 0], sizes = [1, 128], strides = [1, 1]} : vector<2x128xf32> to vector<1x128xf32>
    %134 = vector.extract_strided_slice %132 {offsets = [0, 0], sizes = [1, 128], strides = [1, 1]} : vector<2x128xf32> to vector<1x128xf32>
    %135 = vector.broadcast %133 : vector<1x128xf32> to vector<16x128xf32>
    %136 = arith.mulf %135, %14 : vector<16x128xf32>
    %137 = vector.broadcast %134 : vector<1x128xf32> to vector<16x128xf32>
    %138 = arith.mulf %137, %19 : vector<16x128xf32>
    %139 = arith.subf %136, %138 : vector<16x128xf32>
    %140 = vector.extract_strided_slice %130 {offsets = [1, 0], sizes = [1, 128], strides = [1, 1]} : vector<2x128xf32> to vector<1x128xf32>
    %141 = vector.extract_strided_slice %132 {offsets = [1, 0], sizes = [1, 128], strides = [1, 1]} : vector<2x128xf32> to vector<1x128xf32>
    %142 = vector.broadcast %140 : vector<1x128xf32> to vector<16x128xf32>
    %143 = arith.mulf %142, %14 : vector<16x128xf32>
    %144 = vector.broadcast %141 : vector<1x128xf32> to vector<16x128xf32>
    %145 = arith.mulf %144, %19 : vector<16x128xf32>
    %146 = arith.subf %143, %145 : vector<16x128xf32>
    %147 = vector.extract_strided_slice %130 {offsets = [0, 0], sizes = [1, 128], strides = [1, 1]} : vector<2x128xf32> to vector<1x128xf32>
    %148 = vector.extract_strided_slice %132 {offsets = [0, 0], sizes = [1, 128], strides = [1, 1]} : vector<2x128xf32> to vector<1x128xf32>
    %149 = vector.broadcast %147 : vector<1x128xf32> to vector<16x128xf32>
    %150 = arith.mulf %149, %19 : vector<16x128xf32>
    %151 = vector.broadcast %148 : vector<1x128xf32> to vector<16x128xf32>
    %152 = arith.mulf %151, %14 : vector<16x128xf32>
    %153 = arith.addf %150, %152 : vector<16x128xf32>
    %154 = vector.extract_strided_slice %130 {offsets = [1, 0], sizes = [1, 128], strides = [1, 1]} : vector<2x128xf32> to vector<1x128xf32>
    %155 = vector.extract_strided_slice %132 {offsets = [1, 0], sizes = [1, 128], strides = [1, 1]} : vector<2x128xf32> to vector<1x128xf32>
    %156 = vector.broadcast %154 : vector<1x128xf32> to vector<16x128xf32>
    %157 = arith.mulf %156, %19 : vector<16x128xf32>
    %158 = vector.broadcast %155 : vector<1x128xf32> to vector<16x128xf32>
    %159 = arith.mulf %158, %14 : vector<16x128xf32>
    %160 = arith.addf %157, %159 : vector<16x128xf32>
    %161 = tpu.concatenate %139, %146, %153, %160 in 0 : vector<16x128xf32>, vector<16x128xf32>, vector<16x128xf32>, vector<16x128xf32> -> vector<64x128xf32>
    %c1_60 = arith.constant 1 : index
    %c1_61 = arith.constant 1 : index
    %c0_62 = arith.constant 0 : index
    %c0_63 = arith.constant 0 : index
    %162 = vector.load %arg7[%c1_60, %c1_61, %c0_62, %c0_63] : memref<2x2x32x64xf32, #tpu.memory_space<vmem>>, vector<1x1x32x64xf32>
    %163 = vector.shape_cast %162 : vector<1x1x32x64xf32> to vector<32x64xf32>
    %cst_64 = arith.constant dense<0.000000e+00> : vector<32x128xf32>
    %164 = tpu.matmul %163, %161, %cst_64 {dimension_numbers = #tpu.dot_dimension_numbers<[1], [0], [0], [1], [0, 0, 1, 1], [], []>} : vector<32x64xf32>, vector<64x128xf32>, vector<32x128xf32> -> vector<32x128xf32>
    %165 = arith.addf %128, %164 : vector<32x128xf32>
    %166 = tpu.concatenate %92, %165 in 0 : vector<32x128xf32>, vector<32x128xf32> -> vector<64x128xf32>
    %c0_65 = arith.constant 0 : index
    %c0_66 = arith.constant 0 : index
    %167 = vector.load %arg8[%c0_65, %c0_66] : memref<64x128xf32, #tpu.memory_space<vmem>>, vector<64x128xf32>
    tpu.vector_store %arg8[%c0_65, %c0_66], %166 {strides = array<i32>} : memref<64x128xf32, #tpu.memory_space<vmem>>, vector<64x128xf32>,
    return
  }
  func.func @transform_0(%arg0: i32) -> (i32, i32, i32) {
    %c0_i32 = arith.constant 0 : i32
    %c0_i32_0 = arith.constant 0 : i32
    %c0_i32_1 = arith.constant 0 : i32
    return %c0_i32, %c0_i32_0, %arg0 : i32, i32, i32
  }
  func.func @transform_1(%arg0: i32) -> (i32, i32, i32) {
    %c0_i32 = arith.constant 0 : i32
    %c0_i32_0 = arith.constant 0 : i32
    %c0_i32_1 = arith.constant 0 : i32
    return %c0_i32, %c0_i32_0, %arg0 : i32, i32, i32
  }
  func.func @transform_2(%arg0: i32) -> (i32, i32) {
    %c0_i32 = arith.constant 0 : i32
    %c0_i32_0 = arith.constant 0 : i32
    return %c0_i32, %arg0 : i32, i32
  }
  func.func @transform_3(%arg0: i32) -> (i32, i32) {
    %c0_i32 = arith.constant 0 : i32
    %c0_i32_0 = arith.constant 0 : i32
    return %c0_i32, %arg0 : i32, i32
  }
  func.func @transform_4(%arg0: i32) -> (i32, i32, i32, i32) {
    %c0_i32 = arith.constant 0 : i32
    %c0_i32_0 = arith.constant 0 : i32
    %c0_i32_1 = arith.constant 0 : i32
    %c0_i32_2 = arith.constant 0 : i32
    return %c0_i32, %c0_i32_0, %c0_i32_1, %arg0 : i32, i32, i32, i32
  }
  func.func @transform_5(%arg0: i32) -> (i32, i32, i32, i32) {
    %c0_i32 = arith.constant 0 : i32
    %c0_i32_0 = arith.constant 0 : i32
    %c0_i32_1 = arith.constant 0 : i32
    %c0_i32_2 = arith.constant 0 : i32
    return %c0_i32, %c0_i32_0, %c0_i32_1, %arg0 : i32, i32, i32, i32
  }
  func.func @transform_6(%arg0: i32) -> (i32, i32, i32, i32) {
    %c0_i32 = arith.constant 0 : i32
    %c0_i32_0 = arith.constant 0 : i32
    %c0_i32_1 = arith.constant 0 : i32
    %c0_i32_2 = arith.constant 0 : i32
    %c0_i32_3 = arith.constant 0 : i32
    return %c0_i32, %c0_i32_0, %c0_i32_1, %c0_i32_2 : i32, i32, i32, i32
  }
  func.func @transform_7(%arg0: i32) -> (i32, i32) {
    %c0_i32 = arith.constant 0 : i32
    %c0_i32_0 = arith.constant 0 : i32
    return %c0_i32, %arg0 : i32, i32
  }
}

</mosaic_0001>

<llo_original>
// kernel: neg.12
$region0: #{neg.12}
  #allocation0 [shape = 's32[1]{0}', space=sflag, size = 0x4, scoped, tag = 'scoped memory for neg.12']
  %s0 = inlined_call_operand.vmem [shape: f32[16,32], index: 0, kind: input, shape index: {}]
  %s1 = inlined_call_operand.vmem [shape: f32[16,32], index: 1, kind: output, shape index: {}]
  %v2 = vld [vmem:[%s0] sm:$0xff]
  %3 = xla_tuple %v2
  %4 = xla_tuple %3
  %v5 = vxor.u32 %v2, 2147483648
  %6 = xla_tuple %v5
  %7 = vst [vmem:[%s1] sm:$0xff] %v5
  %s8 = scalar_lea.vmem %s0, 8
  %v9 = vld [vmem:[%s8] sm:$0xff]
  %10 = xla_tuple %v9
  %11 = xla_tuple %10
  %v12 = vxor.u32 %v9, 2147483648
  %13 = xla_tuple %v12
  %s14 = scalar_lea.vmem %s1, 8
  %15 = vst [vmem:[%s14] sm:$0xff] %v12

// kernel: neg.8
$region0: #{neg.8}
  #allocation0 [shape = 's32[1]{0}', space=sflag, size = 0x4, scoped, tag = 'scoped memory for neg.8']
  %s0 = inlined_call_operand.vmem [shape: f32[16,16], index: 0, kind: input, shape index: {}]
  %s1 = inlined_call_operand.vmem [shape: f32[16,16], index: 1, kind: output, shape index: {}]
  %v2 = vld [vmem:[%s0] sm:$0xff]
  %3 = xla_tuple %v2
  %4 = xla_tuple %3
  %v5 = vxor.u32 %v2, 2147483648
  %6 = xla_tuple %v5
  %7 = vst [vmem:[%s1] sm:$0xff] %v5
  %s8 = scalar_lea.vmem %s0, 8
  %v9 = vld [vmem:[%s8] sm:$0xff]
  %10 = xla_tuple %v9
  %11 = xla_tuple %10
  %v12 = vxor.u32 %v9, 2147483648
  %13 = xla_tuple %v12
  %s14 = scalar_lea.vmem %s1, 8
  %15 = vst [vmem:[%s14] sm:$0xff] %v12

// kernel: harmonic_resnet_block.4
$region0: #{harmonic_resnet_block.4}
  #allocation0 [shape = 'u32[]', space=smem, size = 0x4, offset = 0x4, fixed_abs, tag = 'smem constant byte address 0x4 - core index']
  #allocation1 [shape = 'u32[72,128]{1,0:T(1,128)}', space=vmem, size = 0x9000, scoped, tag = 'internal scratch']
  %s0 = inlined_call_operand.vmem [shape: f32[2,8,128], index: 0, kind: input, shape index: {}]
  %s1 = inlined_call_operand.vmem [shape: f32[2,8,128], index: 1, kind: input, shape index: {}]
  %s2 = inlined_call_operand.vmem [shape: f32[1,128], index: 2, kind: input, shape index: {}]
  %s3 = inlined_call_operand.vmem [shape: f32[1,128], index: 3, kind: input, shape index: {}]
  %s4 = inlined_call_operand.vmem [shape: f32[2,2,2,128], index: 4, kind: input, shape index: {}]
  %s5 = inlined_call_operand.vmem [shape: f32[2,2,2,128], index: 5, kind: input, shape index: {}]
  %s6 = inlined_call_operand.vmem [shape: f32[2,2,32,32], index: 6, kind: input, shape index: {}]
  %s7 = inlined_call_operand.vmem [shape: f32[64,128], index: 7, kind: output, shape index: {}]
  %s8 = sld [smem:[#allocation0]]
  $region38: #{harmonic_resnet_block.4} parent=0
    _
  %s10 = ssub.s32 1, %s8
  %s11 = scalar_select 0, %s10, %s8
  // Predicated region
  $region2: #{harmonic_resnet_block.4} parent=0 // pred_check
    _
  $region3: #{harmonic_resnet_block.4} parent=0 // pred_check_branch
    %13 = sbr.rel (0) target = $region5
  $region4: #{harmonic_resnet_block.4} parent=0 // pred_region
    _
  $region5: #{harmonic_resnet_block.4} parent=0 // pred_fallthru
    _
  // Predicated region
  $region6: #{harmonic_resnet_block.4} parent=0 // pred_check
    _
  $region7: #{harmonic_resnet_block.4} parent=0 // pred_check_branch
    %15 = sbr.rel (0) target = $region9
  $region8: #{harmonic_resnet_block.4} parent=0 // pred_region
    _
  $region9: #{harmonic_resnet_block.4} parent=0 // pred_fallthru
    _
  // Predicated region
  $region10: #{harmonic_resnet_block.4} parent=0 // pred_check
    _
  $region11: #{harmonic_resnet_block.4} parent=0 // pred_check_branch
    %17 = sbr.rel (0) target = $region13
  $region12: #{harmonic_resnet_block.4} parent=0 // pred_region
    _
  $region13: #{harmonic_resnet_block.4} parent=0 // pred_fallthru
    _
  // Predicated region
  $region14: #{harmonic_resnet_block.4} parent=0 // pred_check
    _
  $region15: #{harmonic_resnet_block.4} parent=0 // pred_check_branch
    %19 = sbr.rel (0) target = $region17
  $region16: #{harmonic_resnet_block.4} parent=0 // pred_region
    _
  $region17: #{harmonic_resnet_block.4} parent=0 // pred_fallthru
    _
  // Predicated region
  $region18: #{harmonic_resnet_block.4} parent=0 // pred_check
    _
  $region19: #{harmonic_resnet_block.4} parent=0 // pred_check_branch
    %21 = sbr.rel (0) target = $region21
  $region20: #{harmonic_resnet_block.4} parent=0 // pred_region
    _
  $region21: #{harmonic_resnet_block.4} parent=0 // pred_fallthru
    _
  // Predicated region
  $region22: #{harmonic_resnet_block.4} parent=0 // pred_check
    _
  $region23: #{harmonic_resnet_block.4} parent=0 // pred_check_branch
    %23 = sbr.rel (0) target = $region25
  $region24: #{harmonic_resnet_block.4} parent=0 // pred_region
    _
  $region25: #{harmonic_resnet_block.4} parent=0 // pred_fallthru
    _
  // Predicated region
  $region26: #{harmonic_resnet_block.4} parent=0 // pred_check
    _
  $region27: #{harmonic_resnet_block.4} parent=0 // pred_check_branch
    %25 = sbr.rel (0) target = $region29
  $region28: #{harmonic_resnet_block.4} parent=0 // pred_region
    _
  $region29: #{harmonic_resnet_block.4} parent=0 // pred_fallthru
    _
  %v26 = vld [vmem:[%s2] sm:$0x1]
  %v27 = vld [vmem:[%s3] sm:$0x1]
  %v28 = vld [vmem:[%s0] sm:$0xff]
  %v29 = vld [vmem:[%s1] sm:$0xff]
  %s30 = scalar_lea.vmem %s0, 8
  %v31 = vld [vmem:[%s30] sm:$0xff]
  %s32 = scalar_lea.vmem %s1, 8
  %v33 = vld [vmem:[%s32] sm:$0xff]
  %v35 = vperm.slane %v26, 0
  %v37 = vmul.f32 %v31, %v35
  %v39 = vperm.slane %v27, 0
  %v41 = vmul.f32 %v33, %v39
  %v42 = vsub.f32 %v37, %v41
  %v43 = vmul.f32 %v31, %v39
  %v44 = vmul.f32 %v33, %v35
  %v45 = vadd.f32 %v43, %v44
  %v46 = vld [vmem:[%s4] sm:$0x3]
  %v47 = vld [vmem:[%s5] sm:$0x3]
  %v48 = vperm.slane %v46, 0
  %v49 = vmul.f32 %v48, %v28
  %v50 = vperm.slane %v47, 0
  %v51 = vmul.f32 %v50, %v29
  %v52 = vsub.f32 %v49, %v51
  %v53 = vperm.slane %v46, 1
  %v54 = vmul.f32 %v53, %v28
  %v55 = vperm.slane %v47, 1
  %v56 = vmul.f32 %v55, %v29
  %v57 = vsub.f32 %v54, %v56
  %v58 = vmul.f32 %v48, %v29
  %v59 = vmul.f32 %v50, %v28
  %v60 = vadd.f32 %v58, %v59
  %v61 = vmul.f32 %v53, %v29
  %v62 = vmul.f32 %v55, %v28
  %v63 = vadd.f32 %v61, %v62
  %v64 = vld [vmem:[%s6] sm:$0xff]
  %v65 = vld [vmem:[%s6 + $0x8] sm:$0xff]
  %v66 = vld [vmem:[%s6 + $0x10] sm:$0xff]
  %v67 = vld [vmem:[%s6 + $0x18] sm:$0xff]
  %s68 = scalar_lea.vmem %s4, 2
  %v69 = vld [vmem:[%s68] sm:$0x3]
  %s70 = scalar_lea.vmem %s5, 2
  %v71 = vld [vmem:[%s70] sm:$0x3]
  %v72 = vperm.slane %v69, 0
  %v73 = vmul.f32 %v72, %v42
  %v74 = vperm.slane %v71, 0
  %v75 = vmul.f32 %v74, %v45
  %v76 = vsub.f32 %v73, %v75
  %v77 = vperm.slane %v69, 1
  %v78 = vmul.f32 %v77, %v42
  %v79 = vperm.slane %v71, 1
  %v80 = vmul.f32 %v79, %v45
  %v81 = vsub.f32 %v78, %v80
  %v82 = vmul.f32 %v72, %v45
  %v83 = vmul.f32 %v74, %v42
  %v84 = vadd.f32 %v82, %v83
  %v85 = vmul.f32 %v77, %v45
  %v86 = vmul.f32 %v79, %v42
  %v87 = vadd.f32 %v85, %v86
  %s88 = scalar_lea.vmem %s6, 32
  %v89 = vld [vmem:[%s88] sm:$0xff]
  %v90 = vld [vmem:[%s88 + $0x8] sm:$0xff]
  %v91 = vld [vmem:[%s88 + $0x10] sm:$0xff]
  %v92 = vld [vmem:[%s88 + $0x18] sm:$0xff]
  %vm93 = vcmask 261120
  %v95 = vsel %vm93, %v89, 0
  %v98 = vsel %vm93, %v90, 0
  %v101 = vsel %vm93, %v91, 0
  %v104 = vsel %vm93, %v92, 0
  %106 = vmatpush.msra.mxu0 0.0
  %107 = vmatpush.msra.mxu0 0.0
  %108 = vmatpush.msra.mxu0 0.0
  %109 = vmatpush.msra.mxu0 0.0
  %110 = vmatpush.msra.mxu0 0.0
  %111 = vmatpush.msra.mxu0 0.0
  %112 = vmatpush.msra.mxu0 0.0
  %113 = vmatpush.msra.mxu0 0.0
  %114 = vmatpush.msra.mxu0 0.0
  %115 = vmatpush.msra.mxu0 0.0
  %116 = vmatpush.msra.mxu0 0.0
  %117 = vmatpush.msra.mxu0 0.0
  %118 = vmatpush.msra.mxu0 %v87
  %119 = vmatpush.msra.mxu0 %v84
  %120 = vmatpush.msra.mxu0 %v81
  %121 = vmatpush.msra.mxu0 %v76
  %122 = vmatmul.f32.gmra.mxu0 %v95
  %v123 = vpop.f32.mrf.mxu0
  %v124 = vadd.f32 0.0, %v123
  %125 = vmatmul.f32.gmra.mxu0 %v98
  %v126 = vpop.f32.mrf.mxu0
  %v127 = vadd.f32 0.0, %v126
  %128 = vmatmul.f32.gmra.mxu0 %v101
  %v129 = vpop.f32.mrf.mxu0
  %v130 = vadd.f32 0.0, %v129
  %131 = vmatmul.f32.gmra.mxu0 %v104
  %v132 = vpop.f32.mrf.mxu0
  %v133 = vadd.f32 0.0, %v132
  %134 = vdwg.mxu0
  %v136 = vsel %vm93, %v64, 0
  %v139 = vsel %vm93, %v65, 0
  %v142 = vsel %vm93, %v66, 0
  %v145 = vsel %vm93, %v67, 0
  %147 = vmatpush.msra.mxu0 0.0
  %148 = vmatpush.msra.mxu0 0.0
  %149 = vmatpush.msra.mxu0 0.0
  %150 = vmatpush.msra.mxu0 0.0
  %151 = vmatpush.msra.mxu0 0.0
  %152 = vmatpush.msra.mxu0 0.0
  %153 = vmatpush.msra.mxu0 0.0
  %154 = vmatpush.msra.mxu0 0.0
  %155 = vmatpush.msra.mxu0 0.0
  %156 = vmatpush.msra.mxu0 0.0
  %157 = vmatpush.msra.mxu0 0.0
  %158 = vmatpush.msra.mxu0 0.0
  %159 = vmatpush.msra.mxu0 %v63
  %160 = vmatpush.msra.mxu0 %v60
  %161 = vmatpush.msra.mxu0 %v57
  %162 = vmatpush.msra.mxu0 %v52
  %163 = vmatmul.f32.gmra.mxu0 %v136
  %v164 = vpop.f32.mrf.mxu0
  %v165 = vadd.f32 %v124, %v164
  %166 = vmatmul.f32.gmra.mxu0 %v139
  %v167 = vpop.f32.mrf.mxu0
  %v168 = vadd.f32 %v127, %v167
  %169 = vmatmul.f32.gmra.mxu0 %v142
  %v170 = vpop.f32.mrf.mxu0
  %v171 = vadd.f32 %v130, %v170
  %172 = vmatmul.f32.gmra.mxu0 %v145
  %v173 = vpop.f32.mrf.mxu0
  %v174 = vadd.f32 %v133, %v173
  %175 = vdwg.mxu0
  %s176 = scalar_lea.vmem %s4, 4
  %v177 = vld [vmem:[%s176] sm:$0x3]
  %s178 = scalar_lea.vmem %s5, 4
  %v179 = vld [vmem:[%s178] sm:$0x3]
  %v180 = vperm.slane %v177, 0
  %v181 = vmul.f32 %v180, %v28
  %v182 = vperm.slane %v179, 0
  %v183 = vmul.f32 %v182, %v29
  %v184 = vsub.f32 %v181, %v183
  %v185 = vperm.slane %v177, 1
  %v186 = vmul.f32 %v185, %v28
  %v187 = vperm.slane %v179, 1
  %v188 = vmul.f32 %v187, %v29
  %v189 = vsub.f32 %v186, %v188
  %v190 = vmul.f32 %v180, %v29
  %v191 = vmul.f32 %v182, %v28
  %v192 = vadd.f32 %v190, %v191
  %v193 = vmul.f32 %v185, %v29
  %v194 = vmul.f32 %v187, %v28
  %v195 = vadd.f32 %v193, %v194
  %s196 = scalar_lea.vmem %s6, 64
  %v197 = vld [vmem:[%s196] sm:$0xff]
  %v198 = vld [vmem:[%s196 + $0x8] sm:$0xff]
  %v199 = vld [vmem:[%s196 + $0x10] sm:$0xff]
  %v200 = vld [vmem:[%s196 + $0x18] sm:$0xff]
  %s201 = scalar_lea.vmem %s4, 6
  %v202 = vld [vmem:[%s201] sm:$0x3]
  %s203 = scalar_lea.vmem %s5, 6
  %v204 = vld [vmem:[%s203] sm:$0x3]
  %v205 = vperm.slane %v202, 0
  %v206 = vmul.f32 %v205, %v42
  %v207 = vperm.slane %v204, 0
  %v208 = vmul.f32 %v207, %v45
  %v209 = vsub.f32 %v206, %v208
  %v210 = vperm.slane %v202, 1
  %v211 = vmul.f32 %v210, %v42
  %v212 = vperm.slane %v204, 1
  %v213 = vmul.f32 %v212, %v45
  %v214 = vsub.f32 %v211, %v213
  %v215 = vmul.f32 %v205, %v45
  %v216 = vmul.f32 %v207, %v42
  %v217 = vadd.f32 %v215, %v216
  %v218 = vmul.f32 %v210, %v45
  %v219 = vmul.f32 %v212, %v42
  %v220 = vadd.f32 %v218, %v219
  %s221 = scalar_lea.vmem %s6, 96
  %v222 = vld [vmem:[%s221] sm:$0xff]
  %v223 = vld [vmem:[%s221 + $0x8] sm:$0xff]
  %v224 = vld [vmem:[%s221 + $0x10] sm:$0xff]
  %v225 = vld [vmem:[%s221 + $0x18] sm:$0xff]
  %v227 = vsel %vm93, %v222, 0
  %v230 = vsel %vm93, %v223, 0
  %v233 = vsel %vm93, %v224, 0
  %v236 = vsel %vm93, %v225, 0
  %238 = vmatpush.msra.mxu0 0.0
  %239 = vmatpush.msra.mxu0 0.0
  %240 = vmatpush.msra.mxu0 0.0
  %241 = vmatpush.msra.mxu0 0.0
  %242 = vmatpush.msra.mxu0 0.0
  %243 = vmatpush.msra.mxu0 0.0
  %244 = vmatpush.msra.mxu0 0.0
  %245 = vmatpush.msra.mxu0 0.0
  %246 = vmatpush.msra.mxu0 0.0
  %247 = vmatpush.msra.mxu0 0.0
  %248 = vmatpush.msra.mxu0 0.0
  %249 = vmatpush.msra.mxu0 0.0
  %250 = vmatpush.msra.mxu0 %v220
  %251 = vmatpush.msra.mxu0 %v217
  %252 = vmatpush.msra.mxu0 %v214
  %253 = vmatpush.msra.mxu0 %v209
  %254 = vmatmul.f32.gmra.mxu0 %v227
  %v255 = vpop.f32.mrf.mxu0
  %v256 = vadd.f32 0.0, %v255
  %257 = vmatmul.f32.gmra.mxu0 %v230
  %v258 = vpop.f32.mrf.mxu0
  %v259 = vadd.f32 0.0, %v258
  %260 = vmatmul.f32.gmra.mxu0 %v233
  %v261 = vpop.f32.mrf.mxu0
  %v262 = vadd.f32 0.0, %v261
  %263 = vmatmul.f32.gmra.mxu0 %v236
  %v264 = vpop.f32.mrf.mxu0
  %v265 = vadd.f32 0.0, %v264
  %266 = vdwg.mxu0
  %v268 = vsel %vm93, %v197, 0
  %v271 = vsel %vm93, %v198, 0
  %v274 = vsel %vm93, %v199, 0
  %v277 = vsel %vm93, %v200, 0
  %279 = vmatpush.msra.mxu0 0.0
  %280 = vmatpush.msra.mxu0 0.0
  %281 = vmatpush.msra.mxu0 0.0
  %282 = vmatpush.msra.mxu0 0.0
  %283 = vmatpush.msra.mxu0 0.0
  %284 = vmatpush.msra.mxu0 0.0
  %285 = vmatpush.msra.mxu0 0.0
  %286 = vmatpush.msra.mxu0 0.0
  %287 = vmatpush.msra.mxu0 0.0
  %288 = vmatpush.msra.mxu0 0.0
  %289 = vmatpush.msra.mxu0 0.0
  %290 = vmatpush.msra.mxu0 0.0
  %291 = vmatpush.msra.mxu0 %v195
  %292 = vmatpush.msra.mxu0 %v192
  %293 = vmatpush.msra.mxu0 %v189
  %294 = vmatpush.msra.mxu0 %v184
  %295 = vmatmul.f32.gmra.mxu0 %v268
  %v296 = vpop.f32.mrf.mxu0
  %v297 = vadd.f32 %v256, %v296
  %298 = vmatmul.f32.gmra.mxu0 %v271
  %v299 = vpop.f32.mrf.mxu0
  %v300 = vadd.f32 %v259, %v299
  %301 = vmatmul.f32.gmra.mxu0 %v274
  %v302 = vpop.f32.mrf.mxu0
  %v303 = vadd.f32 %v262, %v302
  %304 = vmatmul.f32.gmra.mxu0 %v277
  %v305 = vpop.f32.mrf.mxu0
  %v306 = vadd.f32 %v265, %v305
  %307 = vdwg.mxu0
  %308 = vst [vmem:[%s7] sm:$0xff] %v165
  %309 = vst [vmem:[%s7 + $0x8] sm:$0xff] %v168
  %310 = vst [vmem:[%s7 + $0x10] sm:$0xff] %v171
  %311 = vst [vmem:[%s7 + $0x18] sm:$0xff] %v174
  %312 = vst [vmem:[%s7 + $0x20] sm:$0xff] %v297
  %313 = vst [vmem:[%s7 + $0x28] sm:$0xff] %v300
  %314 = vst [vmem:[%s7 + $0x30] sm:$0xff] %v303
  %315 = vst [vmem:[%s7 + $0x38] sm:$0xff] %v306
  // Predicated region
  $region30: #{harmonic_resnet_block.4} parent=0 // pred_check
    _
  $region31: #{harmonic_resnet_block.4} parent=0 // pred_check_branch
    %317 = sbr.rel (0) target = $region33
  $region32: #{harmonic_resnet_block.4} parent=0 // pred_region
    _
  $region33: #{harmonic_resnet_block.4} parent=0 // pred_fallthru
    _
  // Predicated region
  $region34: #{harmonic_resnet_block.4} parent=0 // pred_check
    _
  $region35: #{harmonic_resnet_block.4} parent=0 // pred_check_branch
    %319 = sbr.rel (0) target = $region37
  $region36: #{harmonic_resnet_block.4} parent=0 // pred_region
    _
  $region37: #{harmonic_resnet_block.4} parent=0 // pred_fallthru
    _

// kernel: harmonic_resnet_block.5
$region0: #{harmonic_resnet_block.5}
  #allocation0 [shape = 'u32[]', space=smem, size = 0x4, offset = 0x4, fixed_abs, tag = 'smem constant byte address 0x4 - core index']
  #allocation1 [shape = 'u32[72,128]{1,0:T(1,128)}', space=vmem, size = 0x9000, scoped, tag = 'internal scratch']
  %s0 = inlined_call_operand.vmem [shape: f32[64,16], index: 0, kind: input, shape index: {}]
  %s1 = inlined_call_operand.vmem [shape: f32[64,16], index: 1, kind: input, shape index: {}]
  %s2 = inlined_call_operand.vmem [shape: f32[1,16], index: 2, kind: input, shape index: {}]
  %s3 = inlined_call_operand.vmem [shape: f32[64,16], index: 3, kind: output, shape index: {0}]
  %s4 = inlined_call_operand.vmem [shape: f32[64,16], index: 4, kind: output, shape index: {1}]
  %5 = xla_tuple %s3, %s4
  %s6 = sld [smem:[#allocation0]]
  $region30: #{harmonic_resnet_block.5} parent=0
    _
  %s8 = ssub.s32 1, %s6
  %s9 = scalar_select 0, %s8, %s6
  // Predicated region
  $region2: #{harmonic_resnet_block.5} parent=0 // pred_check
    _
  $region3: #{harmonic_resnet_block.5} parent=0 // pred_check_branch
    %11 = sbr.rel (0) target = $region5
  $region4: #{harmonic_resnet_block.5} parent=0 // pred_region
    _
  $region5: #{harmonic_resnet_block.5} parent=0 // pred_fallthru
    _
  // Predicated region
  $region6: #{harmonic_resnet_block.5} parent=0 // pred_check
    _
  $region7: #{harmonic_resnet_block.5} parent=0 // pred_check_branch
    %13 = sbr.rel (0) target = $region9
  $region8: #{harmonic_resnet_block.5} parent=0 // pred_region
    _
  $region9: #{harmonic_resnet_block.5} parent=0 // pred_fallthru
    _
  // Predicated region
  $region10: #{harmonic_resnet_block.5} parent=0 // pred_check
    _
  $region11: #{harmonic_resnet_block.5} parent=0 // pred_check_branch
    %15 = sbr.rel (0) target = $region13
  $region12: #{harmonic_resnet_block.5} parent=0 // pred_region
    _
  $region13: #{harmonic_resnet_block.5} parent=0 // pred_fallthru
    _
  %v16 = vld [vmem:[%s0] sm:$0xff]
  %v17 = vld [vmem:[%s0 + $0x8] sm:$0xff]
  %v18 = vld [vmem:[%s0 + $0x10] sm:$0xff]
  %v19 = vld [vmem:[%s0 + $0x18] sm:$0xff]
  %v20 = vld [vmem:[%s0 + $0x20] sm:$0xff]
  %v21 = vld [vmem:[%s0 + $0x28] sm:$0xff]
  %v22 = vld [vmem:[%s0 + $0x30] sm:$0xff]
  %v23 = vld [vmem:[%s0 + $0x38] sm:$0xff]
  %v24 = vld [vmem:[%s1] sm:$0xff]
  %v25 = vld [vmem:[%s1 + $0x8] sm:$0xff]
  %v26 = vld [vmem:[%s1 + $0x10] sm:$0xff]
  %v27 = vld [vmem:[%s1 + $0x18] sm:$0xff]
  %v28 = vld [vmem:[%s1 + $0x20] sm:$0xff]
  %v29 = vld [vmem:[%s1 + $0x28] sm:$0xff]
  %v30 = vld [vmem:[%s1 + $0x30] sm:$0xff]
  %v31 = vld [vmem:[%s1 + $0x38] sm:$0xff]
  %v32 = vld [vmem:[%s2] sm:$0x1]
  %v33 = vmul.f32 %v16, %v16
  %v34 = vmul.f32 %v17, %v17
  %v35 = vmul.f32 %v18, %v18
  %v36 = vmul.f32 %v19, %v19
  %v37 = vmul.f32 %v20, %v20
  %v38 = vmul.f32 %v21, %v21
  %v39 = vmul.f32 %v22, %v22
  %v40 = vmul.f32 %v23, %v23
  %v41 = vmul.f32 %v24, %v24
  %v42 = vmul.f32 %v25, %v25
  %v43 = vmul.f32 %v26, %v26
  %v44 = vmul.f32 %v27, %v27
  %v45 = vmul.f32 %v28, %v28
  %v46 = vmul.f32 %v29, %v29
  %v47 = vmul.f32 %v30, %v30
  %v48 = vmul.f32 %v31, %v31
  %v49 = vadd.f32 %v33, %v41
  %v50 = vadd.f32 %v34, %v42
  %v51 = vadd.f32 %v35, %v43
  %v52 = vadd.f32 %v36, %v44
  %v53 = vadd.f32 %v37, %v45
  %v54 = vadd.f32 %v38, %v46
  %v55 = vadd.f32 %v39, %v47
  %v56 = vadd.f32 %v40, %v48
  %v57 = vmax.f32 %v49, 1e-12
  %v58 = vmax.f32 %v50, 1e-12
  %v59 = vmax.f32 %v51, 1e-12
  %v60 = vmax.f32 %v52, 1e-12
  %v61 = vmax.f32 %v53, 1e-12
  %v62 = vmax.f32 %v54, 1e-12
  %v63 = vmax.f32 %v55, 1e-12
  %v64 = vmax.f32 %v56, 1e-12
  %v65 = vrsqrt.pop %v57
  %v66 = vmul.f32 %v65, %v57
  %v67 = vmul.f32 %v66, %v65
  %v68 = vmul.f32 0.5, %v67
  %v69 = vsub.f32 1.5, %v68
  %v70 = vmul.f32 %v65, %v69
  %vm71 = vweird.f32 %v57
  %vm72 = vweird.f32 %v65
  %vm73 = vmor %vm71, %vm72
  %v74 = vsel %vm73, %v65, %v70
  %v75 = vrsqrt.pop %v58
  %v76 = vmul.f32 %v75, %v58
  %v77 = vmul.f32 %v76, %v75
  %v78 = vmul.f32 0.5, %v77
  %v79 = vsub.f32 1.5, %v78
  %v80 = vmul.f32 %v75, %v79
  %vm81 = vweird.f32 %v58
  %vm82 = vweird.f32 %v75
  %vm83 = vmor %vm81, %vm82
  %v84 = vsel %vm83, %v75, %v80
  %v85 = vrsqrt.pop %v59
  %v86 = vmul.f32 %v85, %v59
  %v87 = vmul.f32 %v86, %v85
  %v88 = vmul.f32 0.5, %v87
  %v89 = vsub.f32 1.5, %v88
  %v90 = vmul.f32 %v85, %v89
  %vm91 = vweird.f32 %v59
  %vm92 = vweird.f32 %v85
  %vm93 = vmor %vm91, %vm92
  %v94 = vsel %vm93, %v85, %v90
  %v95 = vrsqrt.pop %v60
  %v96 = vmul.f32 %v95, %v60
  %v97 = vmul.f32 %v96, %v95
  %v98 = vmul.f32 0.5, %v97
  %v99 = vsub.f32 1.5, %v98
  %v100 = vmul.f32 %v95, %v99
  %vm101 = vweird.f32 %v60
  %vm102 = vweird.f32 %v95
  %vm103 = vmor %vm101, %vm102
  %v104 = vsel %vm103, %v95, %v100
  %v105 = vrsqrt.pop %v61
  %v106 = vmul.f32 %v105, %v61
  %v107 = vmul.f32 %v106, %v105
  %v108 = vmul.f32 0.5, %v107
  %v109 = vsub.f32 1.5, %v108
  %v110 = vmul.f32 %v105, %v109
  %vm111 = vweird.f32 %v61
  %vm112 = vweird.f32 %v105
  %vm113 = vmor %vm111, %vm112
  %v114 = vsel %vm113, %v105, %v110
  %v115 = vrsqrt.pop %v62
  %v116 = vmul.f32 %v115, %v62
  %v117 = vmul.f32 %v116, %v115
  %v118 = vmul.f32 0.5, %v117
  %v119 = vsub.f32 1.5, %v118
  %v120 = vmul.f32 %v115, %v119
  %vm121 = vweird.f32 %v62
  %vm122 = vweird.f32 %v115
  %vm123 = vmor %vm121, %vm122
  %v124 = vsel %vm123, %v115, %v120
  %v125 = vrsqrt.pop %v63
  %v126 = vmul.f32 %v125, %v63
  %v127 = vmul.f32 %v126, %v125
  %v128 = vmul.f32 0.5, %v127
  %v129 = vsub.f32 1.5, %v128
  %v130 = vmul.f32 %v125, %v129
  %vm131 = vweird.f32 %v63
  %vm132 = vweird.f32 %v125
  %vm133 = vmor %vm131, %vm132
  %v134 = vsel %vm133, %v125, %v130
  %v135 = vrsqrt.pop %v64
  %v136 = vmul.f32 %v135, %v64
  %v137 = vmul.f32 %v136, %v135
  %v138 = vmul.f32 0.5, %v137
  %v139 = vsub.f32 1.5, %v138
  %v140 = vmul.f32 %v135, %v139
  %vm141 = vweird.f32 %v64
  %vm142 = vweird.f32 %v135
  %vm143 = vmor %vm141, %vm142
  %v144 = vsel %vm143, %v135, %v140
  %v145 = vmul.f32 %v57, %v74
  %v146 = vmul.f32 %v58, %v84
  %v147 = vmul.f32 %v59, %v94
  %v148 = vmul.f32 %v60, %v104
  %v149 = vmul.f32 %v61, %v114
  %v150 = vmul.f32 %v62, %v124
  %v151 = vmul.f32 %v63, %v134
  %v152 = vmul.f32 %v64, %v144
  %v154 = vperm.slane %v32, 0
  %v156 = vadd.f32 %v145, %v154
  %v157 = vadd.f32 %v146, %v154
  %v158 = vadd.f32 %v147, %v154
  %v159 = vadd.f32 %v148, %v154
  %v160 = vadd.f32 %v149, %v154
  %v161 = vadd.f32 %v150, %v154
  %v162 = vadd.f32 %v151, %v154
  %v163 = vadd.f32 %v152, %v154
  %v164 = vmax.f32 %v156, 0.0
  %v165 = vmax.f32 %v157, 0.0
  %v166 = vmax.f32 %v158, 0.0
  %v167 = vmax.f32 %v159, 0.0
  %v168 = vmax.f32 %v160, 0.0
  %v169 = vmax.f32 %v161, 0.0
  %v170 = vmax.f32 %v162, 0.0
  %v171 = vmax.f32 %v163, 0.0
  %v172 = vmul.f32 %v164, %v74
  %v173 = vmul.f32 %v165, %v84
  %v174 = vmul.f32 %v166, %v94
  %v175 = vmul.f32 %v167, %v104
  %v176 = vmul.f32 %v168, %v114
  %v177 = vmul.f32 %v169, %v124
  %v178 = vmul.f32 %v170, %v134
  %v179 = vmul.f32 %v171, %v144
  %v180 = vmul.f32 %v172, %v16
  %v181 = vmul.f32 %v173, %v17
  %v182 = vmul.f32 %v174, %v18
  %v183 = vmul.f32 %v175, %v19
  %v184 = vmul.f32 %v176, %v20
  %v185 = vmul.f32 %v177, %v21
  %v186 = vmul.f32 %v178, %v22
  %v187 = vmul.f32 %v179, %v23
  %vm188 = vcmask 130048
  %189 = vst.msk [vmem:[%s3] sm:$0xff] %vm188, %v180
  %190 = vst.msk [vmem:[%s3 + $0x8] sm:$0xff] %vm188, %v181
  %191 = vst.msk [vmem:[%s3 + $0x10] sm:$0xff] %vm188, %v182
  %192 = vst.msk [vmem:[%s3 + $0x18] sm:$0xff] %vm188, %v183
  %193 = vst.msk [vmem:[%s3 + $0x20] sm:$0xff] %vm188, %v184
  %194 = vst.msk [vmem:[%s3 + $0x28] sm:$0xff] %vm188, %v185
  %195 = vst.msk [vmem:[%s3 + $0x30] sm:$0xff] %vm188, %v186
  %196 = vst.msk [vmem:[%s3 + $0x38] sm:$0xff] %vm188, %v187
  %v197 = vmul.f32 %v172, %v24
  %v198 = vmul.f32 %v173, %v25
  %v199 = vmul.f32 %v174, %v26
  %v200 = vmul.f32 %v175, %v27
  %v201 = vmul.f32 %v176, %v28
  %v202 = vmul.f32 %v177, %v29
  %v203 = vmul.f32 %v178, %v30
  %v204 = vmul.f32 %v179, %v31
  %205 = vst.msk [vmem:[%s4] sm:$0xff] %vm188, %v197
  %206 = vst.msk [vmem:[%s4 + $0x8] sm:$0xff] %vm188, %v198
  %207 = vst.msk [vmem:[%s4 + $0x10] sm:$0xff] %vm188, %v199
  %208 = vst.msk [vmem:[%s4 + $0x18] sm:$0xff] %vm188, %v200
  %209 = vst.msk [vmem:[%s4 + $0x20] sm:$0xff] %vm188, %v201
  %210 = vst.msk [vmem:[%s4 + $0x28] sm:$0xff] %vm188, %v202
  %211 = vst.msk [vmem:[%s4 + $0x30] sm:$0xff] %vm188, %v203
  %212 = vst.msk [vmem:[%s4 + $0x38] sm:$0xff] %vm188, %v204
  // Predicated region
  $region14: #{harmonic_resnet_block.5} parent=0 // pred_check
    _
  $region15: #{harmonic_resnet_block.5} parent=0 // pred_check_branch
    %214 = sbr.rel (0) target = $region17
  $region16: #{harmonic_resnet_block.5} parent=0 // pred_region
    _
  $region17: #{harmonic_resnet_block.5} parent=0 // pred_fallthru
    _
  // Predicated region
  $region18: #{harmonic_resnet_block.5} parent=0 // pred_check
    _
  $region19: #{harmonic_resnet_block.5} parent=0 // pred_check_branch
    %216 = sbr.rel (0) target = $region21
  $region20: #{harmonic_resnet_block.5} parent=0 // pred_region
    _
  $region21: #{harmonic_resnet_block.5} parent=0 // pred_fallthru
    _
  // Predicated region
  $region22: #{harmonic_resnet_block.5} parent=0 // pred_check
    _
  $region23: #{harmonic_resnet_block.5} parent=0 // pred_check_branch
    %218 = sbr.rel (0) target = $region25
  $region24: #{harmonic_resnet_block.5} parent=0 // pred_region
    _
  $region25: #{harmonic_resnet_block.5} parent=0 // pred_fallthru
    _
  // Predicated region
  $region26: #{harmonic_resnet_block.5} parent=0 // pred_check
    _
  $region27: #{harmonic_resnet_block.5} parent=0 // pred_check_branch
    %220 = sbr.rel (0) target = $region29
  $region28: #{harmonic_resnet_block.5} parent=0 // pred_region
    _
  $region29: #{harmonic_resnet_block.5} parent=0 // pred_fallthru
    _

// kernel: harmonic_resnet_block.7
$region0: #{harmonic_resnet_block.7}
  #allocation0 [shape = 'u32[]', space=smem, size = 0x4, offset = 0x4, fixed_abs, tag = 'smem constant byte address 0x4 - core index']
  #allocation1 [shape = 'u32[72,128]{1,0:T(1,128)}', space=vmem, size = 0x9000, scoped, tag = 'internal scratch']
  %s0 = inlined_call_operand.vmem [shape: f32[64,16], index: 0, kind: input, shape index: {}]
  %s1 = inlined_call_operand.vmem [shape: f32[64,16], index: 1, kind: input, shape index: {}]
  %s2 = inlined_call_operand.vmem [shape: f32[64,8], index: 2, kind: input, shape index: {}]
  %s3 = inlined_call_operand.vmem [shape: f32[64,8], index: 3, kind: input, shape index: {}]
  %s4 = inlined_call_operand.vmem [shape: f32[8,16], index: 4, kind: input, shape index: {}]
  %s5 = inlined_call_operand.vmem [shape: f32[1,16], index: 5, kind: input, shape index: {}]
  %s6 = inlined_call_operand.vmem [shape: f32[1,16], index: 6, kind: input, shape index: {}]
  %s7 = inlined_call_operand.vmem [shape: f32[64,16], index: 7, kind: output, shape index: {0}]
  %s8 = inlined_call_operand.vmem [shape: f32[64,16], index: 8, kind: output, shape index: {1}]
  %9 = xla_tuple %s7, %s8
  %s10 = sld [smem:[#allocation0]]
  $region46: #{harmonic_resnet_block.7} parent=0
    _
  %s12 = ssub.s32 1, %s10
  %s13 = scalar_select 0, %s12, %s10
  // Predicated region
  $region2: #{harmonic_resnet_block.7} parent=0 // pred_check
    _
  $region3: #{harmonic_resnet_block.7} parent=0 // pred_check_branch
    %15 = sbr.rel (0) target = $region5
  $region4: #{harmonic_resnet_block.7} parent=0 // pred_region
    _
  $region5: #{harmonic_resnet_block.7} parent=0 // pred_fallthru
    _
  // Predicated region
  $region6: #{harmonic_resnet_block.7} parent=0 // pred_check
    _
  $region7: #{harmonic_resnet_block.7} parent=0 // pred_check_branch
    %17 = sbr.rel (0) target = $region9
  $region8: #{harmonic_resnet_block.7} parent=0 // pred_region
    _
  $region9: #{harmonic_resnet_block.7} parent=0 // pred_fallthru
    _
  // Predicated region
  $region10: #{harmonic_resnet_block.7} parent=0 // pred_check
    _
  $region11: #{harmonic_resnet_block.7} parent=0 // pred_check_branch
    %19 = sbr.rel (0) target = $region13
  $region12: #{harmonic_resnet_block.7} parent=0 // pred_region
    _
  $region13: #{harmonic_resnet_block.7} parent=0 // pred_fallthru
    _
  // Predicated region
  $region14: #{harmonic_resnet_block.7} parent=0 // pred_check
    _
  $region15: #{harmonic_resnet_block.7} parent=0 // pred_check_branch
    %21 = sbr.rel (0) target = $region17
  $region16: #{harmonic_resnet_block.7} parent=0 // pred_region
    _
  $region17: #{harmonic_resnet_block.7} parent=0 // pred_fallthru
    _
  // Predicated region
  $region18: #{harmonic_resnet_block.7} parent=0 // pred_check
    _
  $region19: #{harmonic_resnet_block.7} parent=0 // pred_check_branch
    %23 = sbr.rel (0) target = $region21
  $region20: #{harmonic_resnet_block.7} parent=0 // pred_region
    _
  $region21: #{harmonic_resnet_block.7} parent=0 // pred_fallthru
    _
  // Predicated region
  $region22: #{harmonic_resnet_block.7} parent=0 // pred_check
    _
  $region23: #{harmonic_resnet_block.7} parent=0 // pred_check_branch
    %25 = sbr.rel (0) target = $region25
  $region24: #{harmonic_resnet_block.7} parent=0 // pred_region
    _
  $region25: #{harmonic_resnet_block.7} parent=0 // pred_fallthru
    _
  // Predicated region
  $region26: #{harmonic_resnet_block.7} parent=0 // pred_check
    _
  $region27: #{harmonic_resnet_block.7} parent=0 // pred_check_branch
    %27 = sbr.rel (0) target = $region29
  $region28: #{harmonic_resnet_block.7} parent=0 // pred_region
    _
  $region29: #{harmonic_resnet_block.7} parent=0 // pred_fallthru
    _
  %v28 = vld [vmem:[%s4] sm:$0xff]
  %v29 = vld [vmem:[%s5] sm:$0x1]
  %v30 = vld [vmem:[%s0] sm:$0xff]
  %v31 = vld [vmem:[%s0 + $0x8] sm:$0xff]
  %v32 = vld [vmem:[%s0 + $0x10] sm:$0xff]
  %v33 = vld [vmem:[%s0 + $0x18] sm:$0xff]
  %v34 = vld [vmem:[%s0 + $0x20] sm:$0xff]
  %v35 = vld [vmem:[%s0 + $0x28] sm:$0xff]
  %v36 = vld [vmem:[%s0 + $0x30] sm:$0xff]
  %v37 = vld [vmem:[%s0 + $0x38] sm:$0xff]
  %v38 = vld [vmem:[%s2] sm:$0xff]
  %v39 = vld [vmem:[%s2 + $0x8] sm:$0xff]
  %v40 = vld [vmem:[%s2 + $0x10] sm:$0xff]
  %v41 = vld [vmem:[%s2 + $0x18] sm:$0xff]
  %v42 = vld [vmem:[%s2 + $0x20] sm:$0xff]
  %v43 = vld [vmem:[%s2 + $0x28] sm:$0xff]
  %v44 = vld [vmem:[%s2 + $0x30] sm:$0xff]
  %v45 = vld [vmem:[%s2 + $0x38] sm:$0xff]
  %vm46 = vcmask 64512
  %v48 = vsel %vm46, %v38, 0
  %v51 = vsel %vm46, %v39, 0
  %v54 = vsel %vm46, %v40, 0
  %v57 = vsel %vm46, %v41, 0
  %v60 = vsel %vm46, %v42, 0
  %v63 = vsel %vm46, %v43, 0
  %v66 = vsel %vm46, %v44, 0
  %v69 = vsel %vm46, %v45, 0
  %71 = vmatpush.msra.mxu0 0.0
  %72 = vmatpush.msra.mxu0 0.0
  %73 = vmatpush.msra.mxu0 0.0
  %74 = vmatpush.msra.mxu0 0.0
  %75 = vmatpush.msra.mxu0 0.0
  %76 = vmatpush.msra.mxu0 0.0
  %77 = vmatpush.msra.mxu0 0.0
  %78 = vmatpush.msra.mxu0 0.0
  %79 = vmatpush.msra.mxu0 0.0
  %80 = vmatpush.msra.mxu0 0.0
  %81 = vmatpush.msra.mxu0 0.0
  %82 = vmatpush.msra.mxu0 0.0
  %83 = vmatpush.msra.mxu0 0.0
  %84 = vmatpush.msra.mxu0 0.0
  %85 = vmatpush.msra.mxu0 0.0
  %86 = vmatpush.msra.mxu0 %v28
  %87 = vmatmul.f32.gmra.mxu0 %v48
  %v88 = vpop.f32.mrf.mxu0
  %v89 = vadd.f32 0.0, %v88
  %90 = vmatmul.f32.gmra.mxu0 %v51
  %v91 = vpop.f32.mrf.mxu0
  %v92 = vadd.f32 0.0, %v91
  %93 = vmatmul.f32.gmra.mxu0 %v54
  %v94 = vpop.f32.mrf.mxu0
  %v95 = vadd.f32 0.0, %v94
  %96 = vmatmul.f32.gmra.mxu0 %v57
  %v97 = vpop.f32.mrf.mxu0
  %v98 = vadd.f32 0.0, %v97
  %99 = vmatmul.f32.gmra.mxu0 %v60
  %v100 = vpop.f32.mrf.mxu0
  %v101 = vadd.f32 0.0, %v100
  %102 = vmatmul.f32.gmra.mxu0 %v63
  %v103 = vpop.f32.mrf.mxu0
  %v104 = vadd.f32 0.0, %v103
  %105 = vmatmul.f32.gmra.mxu0 %v66
  %v106 = vpop.f32.mrf.mxu0
  %v107 = vadd.f32 0.0, %v106
  %108 = vmatmul.f32.gmra.mxu0 %v69
  %v109 = vpop.f32.mrf.mxu0
  %v110 = vadd.f32 0.0, %v109
  %111 = vdwg.mxu0
  %v112 = vadd.f32 %v30, %v89
  %v113 = vadd.f32 %v31, %v92
  %v114 = vadd.f32 %v32, %v95
  %v115 = vadd.f32 %v33, %v98
  %v116 = vadd.f32 %v34, %v101
  %v117 = vadd.f32 %v35, %v104
  %v118 = vadd.f32 %v36, %v107
  %v119 = vadd.f32 %v37, %v110
  %v121 = vperm.slane %v29, 0
  %v123 = vadd.f32 %v112, %v121
  %v124 = vadd.f32 %v113, %v121
  %v125 = vadd.f32 %v114, %v121
  %v126 = vadd.f32 %v115, %v121
  %v127 = vadd.f32 %v116, %v121
  %v128 = vadd.f32 %v117, %v121
  %v129 = vadd.f32 %v118, %v121
  %v130 = vadd.f32 %v119, %v121
  %v131 = vld [vmem:[%s1] sm:$0xff]
  %v132 = vld [vmem:[%s1 + $0x8] sm:$0xff]
  %v133 = vld [vmem:[%s1 + $0x10] sm:$0xff]
  %v134 = vld [vmem:[%s1 + $0x18] sm:$0xff]
  %v135 = vld [vmem:[%s1 + $0x20] sm:$0xff]
  %v136 = vld [vmem:[%s1 + $0x28] sm:$0xff]
  %v137 = vld [vmem:[%s1 + $0x30] sm:$0xff]
  %v138 = vld [vmem:[%s1 + $0x38] sm:$0xff]
  %v139 = vld [vmem:[%s3] sm:$0xff]
  %v140 = vld [vmem:[%s3 + $0x8] sm:$0xff]
  %v141 = vld [vmem:[%s3 + $0x10] sm:$0xff]
  %v142 = vld [vmem:[%s3 + $0x18] sm:$0xff]
  %v143 = vld [vmem:[%s3 + $0x20] sm:$0xff]
  %v144 = vld [vmem:[%s3 + $0x28] sm:$0xff]
  %v145 = vld [vmem:[%s3 + $0x30] sm:$0xff]
  %v146 = vld [vmem:[%s3 + $0x38] sm:$0xff]
  %v148 = vsel %vm46, %v139, 0
  %v151 = vsel %vm46, %v140, 0
  %v154 = vsel %vm46, %v141, 0
  %v157 = vsel %vm46, %v142, 0
  %v160 = vsel %vm46, %v143, 0
  %v163 = vsel %vm46, %v144, 0
  %v166 = vsel %vm46, %v145, 0
  %v169 = vsel %vm46, %v146, 0
  %171 = vmatpush.msra.mxu0 0.0
  %172 = vmatpush.msra.mxu0 0.0
  %173 = vmatpush.msra.mxu0 0.0
  %174 = vmatpush.msra.mxu0 0.0
  %175 = vmatpush.msra.mxu0 0.0
  %176 = vmatpush.msra.mxu0 0.0
  %177 = vmatpush.msra.mxu0 0.0
  %178 = vmatpush.msra.mxu0 0.0
  %179 = vmatpush.msra.mxu0 0.0
  %180 = vmatpush.msra.mxu0 0.0
  %181 = vmatpush.msra.mxu0 0.0
  %182 = vmatpush.msra.mxu0 0.0
  %183 = vmatpush.msra.mxu0 0.0
  %184 = vmatpush.msra.mxu0 0.0
  %185 = vmatpush.msra.mxu0 0.0
  %186 = vmatpush.msra.mxu0 %v28
  %187 = vmatmul.f32.gmra.mxu0 %v148
  %v188 = vpop.f32.mrf.mxu0
  %v189 = vadd.f32 0.0, %v188
  %190 = vmatmul.f32.gmra.mxu0 %v151
  %v191 = vpop.f32.mrf.mxu0
  %v192 = vadd.f32 0.0, %v191
  %193 = vmatmul.f32.gmra.mxu0 %v154
  %v194 = vpop.f32.mrf.mxu0
  %v195 = vadd.f32 0.0, %v194
  %196 = vmatmul.f32.gmra.mxu0 %v157
  %v197 = vpop.f32.mrf.mxu0
  %v198 = vadd.f32 0.0, %v197
  %199 = vmatmul.f32.gmra.mxu0 %v160
  %v200 = vpop.f32.mrf.mxu0
  %v201 = vadd.f32 0.0, %v200
  %202 = vmatmul.f32.gmra.mxu0 %v163
  %v203 = vpop.f32.mrf.mxu0
  %v204 = vadd.f32 0.0, %v203
  %205 = vmatmul.f32.gmra.mxu0 %v166
  %v206 = vpop.f32.mrf.mxu0
  %v207 = vadd.f32 0.0, %v206
  %208 = vmatmul.f32.gmra.mxu0 %v169
  %v209 = vpop.f32.mrf.mxu0
  %v210 = vadd.f32 0.0, %v209
  %211 = vdwg.mxu0
  %v212 = vadd.f32 %v131, %v189
  %v213 = vadd.f32 %v132, %v192
  %v214 = vadd.f32 %v133, %v195
  %v215 = vadd.f32 %v134, %v198
  %v216 = vadd.f32 %v135, %v201
  %v217 = vadd.f32 %v136, %v204
  %v218 = vadd.f32 %v137, %v207
  %v219 = vadd.f32 %v138, %v210
  %v220 = vadd.f32 %v212, %v121
  %v221 = vadd.f32 %v213, %v121
  %v222 = vadd.f32 %v214, %v121
  %v223 = vadd.f32 %v215, %v121
  %v224 = vadd.f32 %v216, %v121
  %v225 = vadd.f32 %v217, %v121
  %v226 = vadd.f32 %v218, %v121
  %v227 = vadd.f32 %v219, %v121
  %v228 = vld [vmem:[%s6] sm:$0x1]
  %v229 = vmul.f32 %v123, %v123
  %v230 = vmul.f32 %v124, %v124
  %v231 = vmul.f32 %v125, %v125
  %v232 = vmul.f32 %v126, %v126
  %v233 = vmul.f32 %v127, %v127
  %v234 = vmul.f32 %v128, %v128
  %v235 = vmul.f32 %v129, %v129
  %v236 = vmul.f32 %v130, %v130
  %v237 = vmul.f32 %v220, %v220
  %v238 = vmul.f32 %v221, %v221
  %v239 = vmul.f32 %v222, %v222
  %v240 = vmul.f32 %v223, %v223
  %v241 = vmul.f32 %v224, %v224
  %v242 = vmul.f32 %v225, %v225
  %v243 = vmul.f32 %v226, %v226
  %v244 = vmul.f32 %v227, %v227
  %v245 = vadd.f32 %v229, %v237
  %v246 = vadd.f32 %v230, %v238
  %v247 = vadd.f32 %v231, %v239
  %v248 = vadd.f32 %v232, %v240
  %v249 = vadd.f32 %v233, %v241
  %v250 = vadd.f32 %v234, %v242
  %v251 = vadd.f32 %v235, %v243
  %v252 = vadd.f32 %v236, %v244
  %v253 = vmax.f32 %v245, 1e-12
  %v254 = vmax.f32 %v246, 1e-12
  %v255 = vmax.f32 %v247, 1e-12
  %v256 = vmax.f32 %v248, 1e-12
  %v257 = vmax.f32 %v249, 1e-12
  %v258 = vmax.f32 %v250, 1e-12
  %v259 = vmax.f32 %v251, 1e-12
  %v260 = vmax.f32 %v252, 1e-12
  %v261 = vrsqrt.pop %v253
  %v262 = vmul.f32 %v261, %v253
  %v263 = vmul.f32 %v262, %v261
  %v264 = vmul.f32 0.5, %v263
  %v265 = vsub.f32 1.5, %v264
  %v266 = vmul.f32 %v261, %v265
  %vm267 = vweird.f32 %v253
  %vm268 = vweird.f32 %v261
  %vm269 = vmor %vm267, %vm268
  %v270 = vsel %vm269, %v261, %v266
  %v271 = vrsqrt.pop %v254
  %v272 = vmul.f32 %v271, %v254
  %v273 = vmul.f32 %v272, %v271
  %v274 = vmul.f32 0.5, %v273
  %v275 = vsub.f32 1.5, %v274
  %v276 = vmul.f32 %v271, %v275
  %vm277 = vweird.f32 %v254
  %vm278 = vweird.f32 %v271
  %vm279 = vmor %vm277, %vm278
  %v280 = vsel %vm279, %v271, %v276
  %v281 = vrsqrt.pop %v255
  %v282 = vmul.f32 %v281, %v255
  %v283 = vmul.f32 %v282, %v281
  %v284 = vmul.f32 0.5, %v283
  %v285 = vsub.f32 1.5, %v284
  %v286 = vmul.f32 %v281, %v285
  %vm287 = vweird.f32 %v255
  %vm288 = vweird.f32 %v281
  %vm289 = vmor %vm287, %vm288
  %v290 = vsel %vm289, %v281, %v286
  %v291 = vrsqrt.pop %v256
  %v292 = vmul.f32 %v291, %v256
  %v293 = vmul.f32 %v292, %v291
  %v294 = vmul.f32 0.5, %v293
  %v295 = vsub.f32 1.5, %v294
  %v296 = vmul.f32 %v291, %v295
  %vm297 = vweird.f32 %v256
  %vm298 = vweird.f32 %v291
  %vm299 = vmor %vm297, %vm298
  %v300 = vsel %vm299, %v291, %v296
  %v301 = vrsqrt.pop %v257
  %v302 = vmul.f32 %v301, %v257
  %v303 = vmul.f32 %v302, %v301
  %v304 = vmul.f32 0.5, %v303
  %v305 = vsub.f32 1.5, %v304
  %v306 = vmul.f32 %v301, %v305
  %vm307 = vweird.f32 %v257
  %vm308 = vweird.f32 %v301
  %vm309 = vmor %vm307, %vm308
  %v310 = vsel %vm309, %v301, %v306
  %v311 = vrsqrt.pop %v258
  %v312 = vmul.f32 %v311, %v258
  %v313 = vmul.f32 %v312, %v311
  %v314 = vmul.f32 0.5, %v313
  %v315 = vsub.f32 1.5, %v314
  %v316 = vmul.f32 %v311, %v315
  %vm317 = vweird.f32 %v258
  %vm318 = vweird.f32 %v311
  %vm319 = vmor %vm317, %vm318
  %v320 = vsel %vm319, %v311, %v316
  %v321 = vrsqrt.pop %v259
  %v322 = vmul.f32 %v321, %v259
  %v323 = vmul.f32 %v322, %v321
  %v324 = vmul.f32 0.5, %v323
  %v325 = vsub.f32 1.5, %v324
  %v326 = vmul.f32 %v321, %v325
  %vm327 = vweird.f32 %v259
  %vm328 = vweird.f32 %v321
  %vm329 = vmor %vm327, %vm328
  %v330 = vsel %vm329, %v321, %v326
  %v331 = vrsqrt.pop %v260
  %v332 = vmul.f32 %v331, %v260
  %v333 = vmul.f32 %v332, %v331
  %v334 = vmul.f32 0.5, %v333
  %v335 = vsub.f32 1.5, %v334
  %v336 = vmul.f32 %v331, %v335
  %vm337 = vweird.f32 %v260
  %vm338 = vweird.f32 %v331
  %vm339 = vmor %vm337, %vm338
  %v340 = vsel %vm339, %v331, %v336
  %v341 = vmul.f32 %v253, %v270
  %v342 = vmul.f32 %v254, %v280
  %v343 = vmul.f32 %v255, %v290
  %v344 = vmul.f32 %v256, %v300
  %v345 = vmul.f32 %v257, %v310
  %v346 = vmul.f32 %v258, %v320
  %v347 = vmul.f32 %v259, %v330
  %v348 = vmul.f32 %v260, %v340
  %v350 = vperm.slane %v228, 0
  %v352 = vadd.f32 %v341, %v350
  %v353 = vadd.f32 %v342, %v350
  %v354 = vadd.f32 %v343, %v350
  %v355 = vadd.f32 %v344, %v350
  %v356 = vadd.f32 %v345, %v350
  %v357 = vadd.f32 %v346, %v350
  %v358 = vadd.f32 %v347, %v350
  %v359 = vadd.f32 %v348, %v350
  %v360 = vmax.f32 %v352, 0.0
  %v361 = vmax.f32 %v353, 0.0
  %v362 = vmax.f32 %v354, 0.0
  %v363 = vmax.f32 %v355, 0.0
  %v364 = vmax.f32 %v356, 0.0
  %v365 = vmax.f32 %v357, 0.0
  %v366 = vmax.f32 %v358, 0.0
  %v367 = vmax.f32 %v359, 0.0
  %v368 = vmul.f32 %v360, %v270
  %v369 = vmul.f32 %v361, %v280
  %v370 = vmul.f32 %v362, %v290
  %v371 = vmul.f32 %v363, %v300
  %v372 = vmul.f32 %v364, %v310
  %v373 = vmul.f32 %v365, %v320
  %v374 = vmul.f32 %v366, %v330
  %v375 = vmul.f32 %v367, %v340
  %v376 = vmul.f32 %v368, %v123
  %v377 = vmul.f32 %v369, %v124
  %v378 = vmul.f32 %v370, %v125
  %v379 = vmul.f32 %v371, %v126
  %v380 = vmul.f32 %v372, %v127
  %v381 = vmul.f32 %v373, %v128
  %v382 = vmul.f32 %v374, %v129
  %v383 = vmul.f32 %v375, %v130
  %vm384 = vcmask 130048
  %385 = vst.msk [vmem:[%s7] sm:$0xff] %vm384, %v376
  %386 = vst.msk [vmem:[%s7 + $0x8] sm:$0xff] %vm384, %v377
  %387 = vst.msk [vmem:[%s7 + $0x10] sm:$0xff] %vm384, %v378
  %388 = vst.msk [vmem:[%s7 + $0x18] sm:$0xff] %vm384, %v379
  %389 = vst.msk [vmem:[%s7 + $0x20] sm:$0xff] %vm384, %v380
  %390 = vst.msk [vmem:[%s7 + $0x28] sm:$0xff] %vm384, %v381
  %391 = vst.msk [vmem:[%s7 + $0x30] sm:$0xff] %vm384, %v382
  %392 = vst.msk [vmem:[%s7 + $0x38] sm:$0xff] %vm384, %v383
  %v393 = vmul.f32 %v368, %v220
  %v394 = vmul.f32 %v369, %v221
  %v395 = vmul.f32 %v370, %v222
  %v396 = vmul.f32 %v371, %v223
  %v397 = vmul.f32 %v372, %v224
  %v398 = vmul.f32 %v373, %v225
  %v399 = vmul.f32 %v374, %v226
  %v400 = vmul.f32 %v375, %v227
  %401 = vst.msk [vmem:[%s8] sm:$0xff] %vm384, %v393
  %402 = vst.msk [vmem:[%s8 + $0x8] sm:$0xff] %vm384, %v394
  %403 = vst.msk [vmem:[%s8 + $0x10] sm:$0xff] %vm384, %v395
  %404 = vst.msk [vmem:[%s8 + $0x18] sm:$0xff] %vm384, %v396
  %405 = vst.msk [vmem:[%s8 + $0x20] sm:$0xff] %vm384, %v397
  %406 = vst.msk [vmem:[%s8 + $0x28] sm:$0xff] %vm384, %v398
  %407 = vst.msk [vmem:[%s8 + $0x30] sm:$0xff] %vm384, %v399
  %408 = vst.msk [vmem:[%s8 + $0x38] sm:$0xff] %vm384, %v400
  // Predicated region
  $region30: #{harmonic_resnet_block.7} parent=0 // pred_check
    _
  $region31: #{harmonic_resnet_block.7} parent=0 // pred_check_branch
    %410 = sbr.rel (0) target = $region33
  $region32: #{harmonic_resnet_block.7} parent=0 // pred_region
    _
  $region33: #{harmonic_resnet_block.7} parent=0 // pred_fallthru
    _
  // Predicated region
  $region34: #{harmonic_resnet_block.7} parent=0 // pred_check
    _
  $region35: #{harmonic_resnet_block.7} parent=0 // pred_check_branch
    %412 = sbr.rel (0) target = $region37
  $region36: #{harmonic_resnet_block.7} parent=0 // pred_region
    _
  $region37: #{harmonic_resnet_block.7} parent=0 // pred_fallthru
    _
  // Predicated region
  $region38: #{harmonic_resnet_block.7} parent=0 // pred_check
    _
  $region39: #{harmonic_resnet_block.7} parent=0 // pred_check_branch
    %414 = sbr.rel (0) target = $region41
  $region40: #{harmonic_resnet_block.7} parent=0 // pred_region
    _
  $region41: #{harmonic_resnet_block.7} parent=0 // pred_fallthru
    _
  // Predicated region
  $region42: #{harmonic_resnet_block.7} parent=0 // pred_check
    _
  $region43: #{harmonic_resnet_block.7} parent=0 // pred_check_branch
    %416 = sbr.rel (0) target = $region45
  $region44: #{harmonic_resnet_block.7} parent=0 // pred_region
    _
  $region45: #{harmonic_resnet_block.7} parent=0 // pred_fallthru
    _

// kernel: harmonic_resnet_block.6
$region0: #{harmonic_resnet_block.6}
  #allocation0 [shape = 'u32[]', space=smem, size = 0x4, offset = 0x4, fixed_abs, tag = 'smem constant byte address 0x4 - core index']
  #allocation1 [shape = 'u32[72,128]{1,0:T(1,128)}', space=vmem, size = 0x9000, scoped, tag = 'internal scratch']
  %s0 = inlined_call_operand.vmem [shape: f32[2,16,128], index: 0, kind: input, shape index: {}]
  %s1 = inlined_call_operand.vmem [shape: f32[2,16,128], index: 1, kind: input, shape index: {}]
  %s2 = inlined_call_operand.vmem [shape: f32[1,128], index: 2, kind: input, shape index: {}]
  %s3 = inlined_call_operand.vmem [shape: f32[1,128], index: 3, kind: input, shape index: {}]
  %s4 = inlined_call_operand.vmem [shape: f32[2,2,2,128], index: 4, kind: input, shape index: {}]
  %s5 = inlined_call_operand.vmem [shape: f32[2,2,2,128], index: 5, kind: input, shape index: {}]
  %s6 = inlined_call_operand.vmem [shape: f32[2,2,32,64], index: 6, kind: input, shape index: {}]
  %s7 = inlined_call_operand.vmem [shape: f32[64,128], index: 7, kind: output, shape index: {}]
  %s8 = sld [smem:[#allocation0]]
  $region38: #{harmonic_resnet_block.6} parent=0
    _
  %s10 = ssub.s32 1, %s8
  %s11 = scalar_select 0, %s10, %s8
  // Predicated region
  $region2: #{harmonic_resnet_block.6} parent=0 // pred_check
    _
  $region3: #{harmonic_resnet_block.6} parent=0 // pred_check_branch
    %13 = sbr.rel (0) target = $region5
  $region4: #{harmonic_resnet_block.6} parent=0 // pred_region
    _
  $region5: #{harmonic_resnet_block.6} parent=0 // pred_fallthru
    _
  // Predicated region
  $region6: #{harmonic_resnet_block.6} parent=0 // pred_check
    _
  $region7: #{harmonic_resnet_block.6} parent=0 // pred_check_branch
    %15 = sbr.rel (0) target = $region9
  $region8: #{harmonic_resnet_block.6} parent=0 // pred_region
    _
  $region9: #{harmonic_resnet_block.6} parent=0 // pred_fallthru
    _
  // Predicated region
  $region10: #{harmonic_resnet_block.6} parent=0 // pred_check
    _
  $region11: #{harmonic_resnet_block.6} parent=0 // pred_check_branch
    %17 = sbr.rel (0) target = $region13
  $region12: #{harmonic_resnet_block.6} parent=0 // pred_region
    _
  $region13: #{harmonic_resnet_block.6} parent=0 // pred_fallthru
    _
  // Predicated region
  $region14: #{harmonic_resnet_block.6} parent=0 // pred_check
    _
  $region15: #{harmonic_resnet_block.6} parent=0 // pred_check_branch
    %19 = sbr.rel (0) target = $region17
  $region16: #{harmonic_resnet_block.6} parent=0 // pred_region
    _
  $region17: #{harmonic_resnet_block.6} parent=0 // pred_fallthru
    _
  // Predicated region
  $region18: #{harmonic_resnet_block.6} parent=0 // pred_check
    _
  $region19: #{harmonic_resnet_block.6} parent=0 // pred_check_branch
    %21 = sbr.rel (0) target = $region21
  $region20: #{harmonic_resnet_block.6} parent=0 // pred_region
    _
  $region21: #{harmonic_resnet_block.6} parent=0 // pred_fallthru
    _
  // Predicated region
  $region22: #{harmonic_resnet_block.6} parent=0 // pred_check
    _
  $region23: #{harmonic_resnet_block.6} parent=0 // pred_check_branch
    %23 = sbr.rel (0) target = $region25
  $region24: #{harmonic_resnet_block.6} parent=0 // pred_region
    _
  $region25: #{harmonic_resnet_block.6} parent=0 // pred_fallthru
    _
  // Predicated region
  $region26: #{harmonic_resnet_block.6} parent=0 // pred_check
    _
  $region27: #{harmonic_resnet_block.6} parent=0 // pred_check_branch
    %25 = sbr.rel (0) target = $region29
  $region28: #{harmonic_resnet_block.6} parent=0 // pred_region
    _
  $region29: #{harmonic_resnet_block.6} parent=0 // pred_fallthru
    _
  %v26 = vld [vmem:[%s2] sm:$0x1]
  %v27 = vld [vmem:[%s3] sm:$0x1]
  %v28 = vld [vmem:[%s0] sm:$0xff]
  %v29 = vld [vmem:[%s0 + $0x8] sm:$0xff]
  %v30 = vld [vmem:[%s1] sm:$0xff]
  %v31 = vld [vmem:[%s1 + $0x8] sm:$0xff]
  %s32 = scalar_lea.vmem %s0, 16
  %v33 = vld [vmem:[%s32] sm:$0xff]
  %v34 = vld [vmem:[%s32 + $0x8] sm:$0xff]
  %s35 = scalar_lea.vmem %s1, 16
  %v36 = vld [vmem:[%s35] sm:$0xff]
  %v37 = vld [vmem:[%s35 + $0x8] sm:$0xff]
  %v39 = vperm.slane %v26, 0
  %v41 = vmul.f32 %v33, %v39
  %v42 = vmul.f32 %v34, %v39
  %v44 = vperm.slane %v27, 0
  %v46 = vmul.f32 %v36, %v44
  %v47 = vmul.f32 %v37, %v44
  %v48 = vsub.f32 %v41, %v46
  %v49 = vsub.f32 %v42, %v47
  %v50 = vmul.f32 %v33, %v44
  %v51 = vmul.f32 %v34, %v44
  %v52 = vmul.f32 %v36, %v39
  %v53 = vmul.f32 %v37, %v39
  %v54 = vadd.f32 %v50, %v52
  %v55 = vadd.f32 %v51, %v53
  %v56 = vld [vmem:[%s4] sm:$0x3]
  %v57 = vld [vmem:[%s5] sm:$0x3]
  %v58 = vperm.slane %v56, 0
  %v59 = vmul.f32 %v58, %v28
  %v60 = vmul.f32 %v58, %v29
  %v61 = vperm.slane %v57, 0
  %v62 = vmul.f32 %v61, %v30
  %v63 = vmul.f32 %v61, %v31
  %v64 = vsub.f32 %v59, %v62
  %v65 = vsub.f32 %v60, %v63
  %v66 = vperm.slane %v56, 1
  %v67 = vmul.f32 %v66, %v28
  %v68 = vmul.f32 %v66, %v29
  %v69 = vperm.slane %v57, 1
  %v70 = vmul.f32 %v69, %v30
  %v71 = vmul.f32 %v69, %v31
  %v72 = vsub.f32 %v67, %v70
  %v73 = vsub.f32 %v68, %v71
  %v74 = vmul.f32 %v58, %v30
  %v75 = vmul.f32 %v58, %v31
  %v76 = vmul.f32 %v61, %v28
  %v77 = vmul.f32 %v61, %v29
  %v78 = vadd.f32 %v74, %v76
  %v79 = vadd.f32 %v75, %v77
  %v80 = vmul.f32 %v66, %v30
  %v81 = vmul.f32 %v66, %v31
  %v82 = vmul.f32 %v69, %v28
  %v83 = vmul.f32 %v69, %v29
  %v84 = vadd.f32 %v80, %v82
  %v85 = vadd.f32 %v81, %v83
  %v86 = vld [vmem:[%s6] sm:$0xff]
  %v87 = vld [vmem:[%s6 + $0x8] sm:$0xff]
  %v88 = vld [vmem:[%s6 + $0x10] sm:$0xff]
  %v89 = vld [vmem:[%s6 + $0x18] sm:$0xff]
  %s90 = scalar_lea.vmem %s4, 2
  %v91 = vld [vmem:[%s90] sm:$0x3]
  %s92 = scalar_lea.vmem %s5, 2
  %v93 = vld [vmem:[%s92] sm:$0x3]
  %v94 = vperm.slane %v91, 0
  %v95 = vmul.f32 %v94, %v48
  %v96 = vmul.f32 %v94, %v49
  %v97 = vperm.slane %v93, 0
  %v98 = vmul.f32 %v97, %v54
  %v99 = vmul.f32 %v97, %v55
  %v100 = vsub.f32 %v95, %v98
  %v101 = vsub.f32 %v96, %v99
  %v102 = vperm.slane %v91, 1
  %v103 = vmul.f32 %v102, %v48
  %v104 = vmul.f32 %v102, %v49
  %v105 = vperm.slane %v93, 1
  %v106 = vmul.f32 %v105, %v54
  %v107 = vmul.f32 %v105, %v55
  %v108 = vsub.f32 %v103, %v106
  %v109 = vsub.f32 %v104, %v107
  %v110 = vmul.f32 %v94, %v54
  %v111 = vmul.f32 %v94, %v55
  %v112 = vmul.f32 %v97, %v48
  %v113 = vmul.f32 %v97, %v49
  %v114 = vadd.f32 %v110, %v112
  %v115 = vadd.f32 %v111, %v113
  %v116 = vmul.f32 %v102, %v54
  %v117 = vmul.f32 %v102, %v55
  %v118 = vmul.f32 %v105, %v48
  %v119 = vmul.f32 %v105, %v49
  %v120 = vadd.f32 %v116, %v118
  %v121 = vadd.f32 %v117, %v119
  %s122 = scalar_lea.vmem %s6, 32
  %v123 = vld [vmem:[%s122] sm:$0xff]
  %v124 = vld [vmem:[%s122 + $0x8] sm:$0xff]
  %v125 = vld [vmem:[%s122 + $0x10] sm:$0xff]
  %v126 = vld [vmem:[%s122 + $0x18] sm:$0xff]
  %vm127 = vcmask 523264
  %v129 = vsel %vm127, %v123, 0
  %v132 = vsel %vm127, %v124, 0
  %v135 = vsel %vm127, %v125, 0
  %v138 = vsel %vm127, %v126, 0
  %140 = vmatpush.msra.mxu0 0.0
  %141 = vmatpush.msra.mxu0 0.0
  %142 = vmatpush.msra.mxu0 0.0
  %143 = vmatpush.msra.mxu0 0.0
  %144 = vmatpush.msra.mxu0 0.0
  %145 = vmatpush.msra.mxu0 0.0
  %146 = vmatpush.msra.mxu0 0.0
  %147 = vmatpush.msra.mxu0 0.0
  %148 = vmatpush.msra.mxu0 %v121
  %149 = vmatpush.msra.mxu0 %v120
  %150 = vmatpush.msra.mxu0 %v115
  %151 = vmatpush.msra.mxu0 %v114
  %152 = vmatpush.msra.mxu0 %v109
  %153 = vmatpush.msra.mxu0 %v108
  %154 = vmatpush.msra.mxu0 %v101
  %155 = vmatpush.msra.mxu0 %v100
  %156 = vmatmul.f32.gmra.mxu0 %v129
  %v157 = vpop.f32.mrf.mxu0
  %v158 = vadd.f32 0.0, %v157
  %159 = vmatmul.f32.gmra.mxu0 %v132
  %v160 = vpop.f32.mrf.mxu0
  %v161 = vadd.f32 0.0, %v160
  %162 = vmatmul.f32.gmra.mxu0 %v135
  %v163 = vpop.f32.mrf.mxu0
  %v164 = vadd.f32 0.0, %v163
  %165 = vmatmul.f32.gmra.mxu0 %v138
  %v166 = vpop.f32.mrf.mxu0
  %v167 = vadd.f32 0.0, %v166
  %168 = vdwg.mxu0
  %v170 = vsel %vm127, %v86, 0
  %v173 = vsel %vm127, %v87, 0
  %v176 = vsel %vm127, %v88, 0
  %v179 = vsel %vm127, %v89, 0
  %181 = vmatpush.msra.mxu0 0.0
  %182 = vmatpush.msra.mxu0 0.0
  %183 = vmatpush.msra.mxu0 0.0
  %184 = vmatpush.msra.mxu0 0.0
  %185 = vmatpush.msra.mxu0 0.0
  %186 = vmatpush.msra.mxu0 0.0
  %187 = vmatpush.msra.mxu0 0.0
  %188 = vmatpush.msra.mxu0 0.0
  %189 = vmatpush.msra.mxu0 %v85
  %190 = vmatpush.msra.mxu0 %v84
  %191 = vmatpush.msra.mxu0 %v79
  %192 = vmatpush.msra.mxu0 %v78
  %193 = vmatpush.msra.mxu0 %v73
  %194 = vmatpush.msra.mxu0 %v72
  %195 = vmatpush.msra.mxu0 %v65
  %196 = vmatpush.msra.mxu0 %v64
  %197 = vmatmul.f32.gmra.mxu0 %v170
  %v198 = vpop.f32.mrf.mxu0
  %v199 = vadd.f32 %v158, %v198
  %200 = vmatmul.f32.gmra.mxu0 %v173
  %v201 = vpop.f32.mrf.mxu0
  %v202 = vadd.f32 %v161, %v201
  %203 = vmatmul.f32.gmra.mxu0 %v176
  %v204 = vpop.f32.mrf.mxu0
  %v205 = vadd.f32 %v164, %v204
  %206 = vmatmul.f32.gmra.mxu0 %v179
  %v207 = vpop.f32.mrf.mxu0
  %v208 = vadd.f32 %v167, %v207
  %209 = vdwg.mxu0
  %s210 = scalar_lea.vmem %s4, 4
  %v211 = vld [vmem:[%s210] sm:$0x3]
  %s212 = scalar_lea.vmem %s5, 4
  %v213 = vld [vmem:[%s212] sm:$0x3]
  %v214 = vperm.slane %v211, 0
  %v215 = vmul.f32 %v214, %v28
  %v216 = vmul.f32 %v214, %v29
  %v217 = vperm.slane %v213, 0
  %v218 = vmul.f32 %v217, %v30
  %v219 = vmul.f32 %v217, %v31
  %v220 = vsub.f32 %v215, %v218
  %v221 = vsub.f32 %v216, %v219
  %v222 = vperm.slane %v211, 1
  %v223 = vmul.f32 %v222, %v28
  %v224 = vmul.f32 %v222, %v29
  %v225 = vperm.slane %v213, 1
  %v226 = vmul.f32 %v225, %v30
  %v227 = vmul.f32 %v225, %v31
  %v228 = vsub.f32 %v223, %v226
  %v229 = vsub.f32 %v224, %v227
  %v230 = vmul.f32 %v214, %v30
  %v231 = vmul.f32 %v214, %v31
  %v232 = vmul.f32 %v217, %v28
  %v233 = vmul.f32 %v217, %v29
  %v234 = vadd.f32 %v230, %v232
  %v235 = vadd.f32 %v231, %v233
  %v236 = vmul.f32 %v222, %v30
  %v237 = vmul.f32 %v222, %v31
  %v238 = vmul.f32 %v225, %v28
  %v239 = vmul.f32 %v225, %v29
  %v240 = vadd.f32 %v236, %v238
  %v241 = vadd.f32 %v237, %v239
  %s242 = scalar_lea.vmem %s6, 64
  %v243 = vld [vmem:[%s242] sm:$0xff]
  %v244 = vld [vmem:[%s242 + $0x8] sm:$0xff]
  %v245 = vld [vmem:[%s242 + $0x10] sm:$0xff]
  %v246 = vld [vmem:[%s242 + $0x18] sm:$0xff]
  %s247 = scalar_lea.vmem %s4, 6
  %v248 = vld [vmem:[%s247] sm:$0x3]
  %s249 = scalar_lea.vmem %s5, 6
  %v250 = vld [vmem:[%s249] sm:$0x3]
  %v251 = vperm.slane %v248, 0
  %v252 = vmul.f32 %v251, %v48
  %v253 = vmul.f32 %v251, %v49
  %v254 = vperm.slane %v250, 0
  %v255 = vmul.f32 %v254, %v54
  %v256 = vmul.f32 %v254, %v55
  %v257 = vsub.f32 %v252, %v255
  %v258 = vsub.f32 %v253, %v256
  %v259 = vperm.slane %v248, 1
  %v260 = vmul.f32 %v259, %v48
  %v261 = vmul.f32 %v259, %v49
  %v262 = vperm.slane %v250, 1
  %v263 = vmul.f32 %v262, %v54
  %v264 = vmul.f32 %v262, %v55
  %v265 = vsub.f32 %v260, %v263
  %v266 = vsub.f32 %v261, %v264
  %v267 = vmul.f32 %v251, %v54
  %v268 = vmul.f32 %v251, %v55
  %v269 = vmul.f32 %v254, %v48
  %v270 = vmul.f32 %v254, %v49
  %v271 = vadd.f32 %v267, %v269
  %v272 = vadd.f32 %v268, %v270
  %v273 = vmul.f32 %v259, %v54
  %v274 = vmul.f32 %v259, %v55
  %v275 = vmul.f32 %v262, %v48
  %v276 = vmul.f32 %v262, %v49
  %v277 = vadd.f32 %v273, %v275
  %v278 = vadd.f32 %v274, %v276
  %s279 = scalar_lea.vmem %s6, 96
  %v280 = vld [vmem:[%s279] sm:$0xff]
  %v281 = vld [vmem:[%s279 + $0x8] sm:$0xff]
  %v282 = vld [vmem:[%s279 + $0x10] sm:$0xff]
  %v283 = vld [vmem:[%s279 + $0x18] sm:$0xff]
  %v285 = vsel %vm127, %v280, 0
  %v288 = vsel %vm127, %v281, 0
  %v291 = vsel %vm127, %v282, 0
  %v294 = vsel %vm127, %v283, 0
  %296 = vmatpush.msra.mxu0 0.0
  %297 = vmatpush.msra.mxu0 0.0
  %298 = vmatpush.msra.mxu0 0.0
  %299 = vmatpush.msra.mxu0 0.0
  %300 = vmatpush.msra.mxu0 0.0
  %301 = vmatpush.msra.mxu0 0.0
  %302 = vmatpush.msra.mxu0 0.0
  %303 = vmatpush.msra.mxu0 0.0
  %304 = vmatpush.msra.mxu0 %v278
  %305 = vmatpush.msra.mxu0 %v277
  %306 = vmatpush.msra.mxu0 %v272
  %307 = vmatpush.msra.mxu0 %v271
  %308 = vmatpush.msra.mxu0 %v266
  %309 = vmatpush.msra.mxu0 %v265
  %310 = vmatpush.msra.mxu0 %v258
  %311 = vmatpush.msra.mxu0 %v257
  %312 = vmatmul.f32.gmra.mxu0 %v285
  %v313 = vpop.f32.mrf.mxu0
  %v314 = vadd.f32 0.0, %v313
  %315 = vmatmul.f32.gmra.mxu0 %v288
  %v316 = vpop.f32.mrf.mxu0
  %v317 = vadd.f32 0.0, %v316
  %318 = vmatmul.f32.gmra.mxu0 %v291
  %v319 = vpop.f32.mrf.mxu0
  %v320 = vadd.f32 0.0, %v319
  %321 = vmatmul.f32.gmra.mxu0 %v294
  %v322 = vpop.f32.mrf.mxu0
  %v323 = vadd.f32 0.0, %v322
  %324 = vdwg.mxu0
  %v326 = vsel %vm127, %v243, 0
  %v329 = vsel %vm127, %v244, 0
  %v332 = vsel %vm127, %v245, 0
  %v335 = vsel %vm127, %v246, 0
  %337 = vmatpush.msra.mxu0 0.0
  %338 = vmatpush.msra.mxu0 0.0
  %339 = vmatpush.msra.mxu0 0.0
  %340 = vmatpush.msra.mxu0 0.0
  %341 = vmatpush.msra.mxu0 0.0
  %342 = vmatpush.msra.mxu0 0.0
  %343 = vmatpush.msra.mxu0 0.0
  %344 = vmatpush.msra.mxu0 0.0
  %345 = vmatpush.msra.mxu0 %v241
  %346 = vmatpush.msra.mxu0 %v240
  %347 = vmatpush.msra.mxu0 %v235
  %348 = vmatpush.msra.mxu0 %v234
  %349 = vmatpush.msra.mxu0 %v229
  %350 = vmatpush.msra.mxu0 %v228
  %351 = vmatpush.msra.mxu0 %v221
  %352 = vmatpush.msra.mxu0 %v220
  %353 = vmatmul.f32.gmra.mxu0 %v326
  %v354 = vpop.f32.mrf.mxu0
  %v355 = vadd.f32 %v314, %v354
  %356 = vmatmul.f32.gmra.mxu0 %v329
  %v357 = vpop.f32.mrf.mxu0
  %v358 = vadd.f32 %v317, %v357
  %359 = vmatmul.f32.gmra.mxu0 %v332
  %v360 = vpop.f32.mrf.mxu0
  %v361 = vadd.f32 %v320, %v360
  %362 = vmatmul.f32.gmra.mxu0 %v335
  %v363 = vpop.f32.mrf.mxu0
  %v364 = vadd.f32 %v323, %v363
  %365 = vdwg.mxu0
  %366 = vst [vmem:[%s7] sm:$0xff] %v199
  %367 = vst [vmem:[%s7 + $0x8] sm:$0xff] %v202
  %368 = vst [vmem:[%s7 + $0x10] sm:$0xff] %v205
  %369 = vst [vmem:[%s7 + $0x18] sm:$0xff] %v208
  %370 = vst [vmem:[%s7 + $0x20] sm:$0xff] %v355
  %371 = vst [vmem:[%s7 + $0x28] sm:$0xff] %v358
  %372 = vst [vmem:[%s7 + $0x30] sm:$0xff] %v361
  %373 = vst [vmem:[%s7 + $0x38] sm:$0xff] %v364
  // Predicated region
  $region30: #{harmonic_resnet_block.6} parent=0 // pred_check
    _
  $region31: #{harmonic_resnet_block.6} parent=0 // pred_check_branch
    %375 = sbr.rel (0) target = $region33
  $region32: #{harmonic_resnet_block.6} parent=0 // pred_region
    _
  $region33: #{harmonic_resnet_block.6} parent=0 // pred_fallthru
    _
  // Predicated region
  $region34: #{harmonic_resnet_block.6} parent=0 // pred_check
    _
  $region35: #{harmonic_resnet_block.6} parent=0 // pred_check_branch
    %377 = sbr.rel (0) target = $region37
  $region36: #{harmonic_resnet_block.6} parent=0 // pred_region
    _
  $region37: #{harmonic_resnet_block.6} parent=0 // pred_fallthru
    _

</llo_original>
